<compile_context>
chip_gen: v7x
topology: tpu7x:2x2x1
jax: 0.10.0
libtpu: 0.0.40
codegen_flags: <defaults>
</compile_context>

<pallas_src>
import numpy as np
import jax
import jax.numpy as jnp
from jax.experimental import pallas as pl
from jax.experimental.pallas import tpu as pltpu

# ---- scaled-down config (original values in comments) -----------------------
BATCH = 8
CHANNELS = 8        # original: 100
DIM_SIZE = 64       # original: 242
HIDDEN_SIZE = 8     # original: 50
NUM_FILTERS1 = 16   # original: 200
NUM_FILTERS2 = 16   # original: 200
NUM_L1 = 16         # original: 200
NUM_L2 = 8          # original: 100
GE_FEATURES = 8     # original: 27 (x_train_GE.shape[1])
NUM_CLASSES = 1
BN_EPS = 1e-5

# derived conv/pool geometry (kernel=2, stride=2, pad=1; pool kernel=2, stride=2)
L1 = (DIM_SIZE - 2 + 2) // 2 + 1     # conv1 output length (33)
P1 = L1 // 2                         # pooled length after conv1 (16)
L2 = (P1 - 2 + 2) // 2 + 1           # conv2 output length (9)
P2 = L2 // 2                         # pooled length after conv2 (4)
T = P2                               # LSTM sequence length
B = BATCH
H = HIDDEN_SIZE

VMEM_SPEC = pl.BlockSpec(memory_space=pltpu.MemorySpace.VMEM)

# ---- packed constant-slab layout (one DMA carries every weight/bias) --------
SLAB_COLS = 128


def _make_slab_layout():
    entries = [
        ('w1',      2 * CHANNELS,   NUM_FILTERS1),   # conv1 (bn0 folded)
        ('w2a',     NUM_FILTERS1,   NUM_FILTERS2),   # conv2 tap0 (bn1 folded)
        ('w2b',     NUM_FILTERS1,   NUM_FILTERS2),   # conv2 tap1 (bn1 folded)
        ('wih0',    NUM_FILTERS2,   8 * H),          # LSTM l0 in->gates (bn2 folded)
        ('wih1',    2 * H,          8 * H),          # LSTM l1 in->gates
        ('whh0',    H,              8 * H),          # LSTM l0 recurrent [fwd | bwd]
        ('whh1',    H,              8 * H),          # LSTM l1 recurrent [fwd | bwd]
        ('wl1',     GE_FEATURES,    NUM_L1),
        ('wl2',     NUM_L1,         NUM_L2),         # (l1_bn folded)
        ('wo',      2 * H + NUM_L2, 1),              # l_out (l2_bn folded)
        ('dirmask', 2 * BATCH,      4 * H),          # 1.0 on fwd rows, 0.0 on bwd rows
        ('b1',      1, NUM_FILTERS1),
        ('ca',      1, NUM_FILTERS2),
        ('cb',      1, NUM_FILTERS2),
        ('b2',      1, NUM_FILTERS2),
        ('bg0',     1, 8 * H),
        ('bg1',     1, 8 * H),
        ('bl1',     1, NUM_L1),
        ('bl2',     1, NUM_L2),
        ('bo',      1, 1),
    ]
    layout, r = {}, 0
    for name, nr, nc in entries:
        assert nc <= SLAB_COLS
        layout[name] = (r, nr, nc)
        r += nr
    return layout, ((r + 7) // 8) * 8


SLAB_LAYOUT, SLAB_ROWS = _make_slab_layout()


# =============================== fused kernel ================================

def net_kernel(cols_e_ref, cols_o_ref, ge_ref, sel_ref, slab_ref, o_ref, x1_ref):
    f32 = jnp.float32
    H4 = 4 * H

    def dot(a, b):
        return jnp.dot(a, b, preferred_element_type=f32)

    def sl(name):
        r, nr, nc = SLAB_LAYOUT[name]
        return slab_ref[pl.ds(r, nr), pl.ds(0, nc)]

    # ---- conv1 (bn0 & bias folded) -> maxpool(2,2) -> relu -------------------
    # cols_e / cols_o: im2col slabs of the RAW input for the even / odd conv
    # positions of each pooled position (rows b*P1+p, cols [tap0 C | tap1 C]).
    w1 = sl('w1')                                                   # (2C, F1)
    ye = dot(cols_e_ref[...], w1)
    yo = dot(cols_o_ref[...], w1)
    pool1 = jnp.maximum(jnp.maximum(ye, yo) + sl('b1'), 0.0)        # (B*P1, F1)

    # ---- conv2 (bn1 folded) -> maxpool(2,2) -> relu --------------------------
    # Apply each conv2 tap's weight to every pooled-1 position, then gather both
    # conv2 positions of every pooled-2 position with ONE precomputed 0/1
    # selection matmul (its all-zero rows reproduce conv2's left zero padding).
    # Output rows are time-major: q = t*B + b.
    pa = dot(pool1, sl('w2a')) + sl('ca')                           # (B*P1, F2)
    pb = dot(pool1, sl('w2b')) + sl('cb')
    y2 = dot(sel_ref[...], jnp.concatenate([pa, pb], axis=0))       # (2*B*P2, F2)
    n2 = B * P2
    seq = jnp.maximum(jnp.maximum(y2[:n2], y2[n2:]) + sl('b2'), 0.0)  # (T*B, F2)

    # ---- 2-layer bidirectional LSTM (gate order repacked to [i, f, o | g]) ---
    # fwd+bwd directions run as one batched (2B, H) recurrence per layer; the
    # input-to-hidden projections are hoisted out of the time loop (bn2 folded
    # into layer-0's).  dirmask selects fwd vs bwd recurrent-gate columns.
    dirmask = sl('dirmask') > 0.5                                   # (2B, 4H) bool

    def lstm_layer(gates, whh, store_x1):
        # gates: (T*B, 8H) = [fwd i,f,o,g | bwd i,f,o,g], rows time-major.
        gx = [jnp.concatenate([gates[s * B:(s + 1) * B, 0:H4],
                               gates[(T - 1 - s) * B:(T - s) * B, H4:2 * H4]],
                              axis=0)
              for s in range(T)]            # state-independent -> off the recurrence chain
        hh = jnp.zeros((2 * B, H), f32)
        cc = jnp.zeros((2 * B, H), f32)
        for s in range(T):
            if s == 0:
                g = gx[0]
            else:
                full = dot(hh, whh)                                 # (2B, 8H)
                g = gx[s] + jnp.where(dirmask, full[:, 0:H4], full[:, H4:2 * H4])
            sfo = jax.nn.sigmoid(g[:, 0:3 * H])                     # i | f | o
            gg = jnp.tanh(g[:, 3 * H:4 * H])
            cc = sfo[:, 0:H] * gg if s == 0 else sfo[:, H:2 * H] * cc + sfo[:, 0:H] * gg
            hh = sfo[:, 2 * H:3 * H] * jnp.tanh(cc)
            if store_x1:
                x1_ref[pl.ds(s * B, B), pl.ds(0, H)] = hh[0:B]                 # fwd @ time s
                x1_ref[pl.ds((T - 1 - s) * B, B), pl.ds(H, H)] = hh[B:2 * B]   # bwd @ time T-1-s
        return hh

    gates0 = dot(seq, sl('wih0')) + sl('bg0')                       # (T*B, 8H)
    lstm_layer(gates0, sl('whh0'), store_x1=True)
    gates1 = dot(x1_ref[...], sl('wih1')) + sl('bg1')               # (T*B, 8H)
    hh1 = lstm_layer(gates1, sl('whh1'), store_x1=False)
    cat = jnp.concatenate([hh1[0:B], hh1[B:2 * B]], axis=1)         # (B, 2H) = [h[-2] | h[-1]]

    # ---- GE MLP (l1_bn / l2_bn folded forward) + output head -----------------
    h1 = jnp.maximum(dot(ge_ref[...], sl('wl1')) + sl('bl1'), 0.0)
    h2 = jnp.maximum(dot(h1, sl('wl2')) + sl('bl2'), 0.0)
    feat = jnp.concatenate([cat, h2], axis=1)                       # (B, 2H + L2n)
    o_ref[...] = jax.nn.sigmoid(dot(feat, sl('wo')) + sl('bo'))


# =============================== glue / wrappers =============================

def bn_fold(bn):
    scale = bn['gamma'] * jax.lax.rsqrt(bn['var'] + BN_EPS)
    shift = bn['beta'] - bn['mean'] * scale
    return scale, shift


def _reorder_gates(w):
    """torch LSTM gate order [i, f, g, o] -> kernel order [i, f, o, g] (leading 4H axis)."""
    return jnp.concatenate([w[0:2 * H], w[3 * H:4 * H], w[2 * H:3 * H]], axis=0)


def _build_sel():
    """0/1 matrix gathering conv2's two taps for the even/odd conv positions of
    every pooled-2 position; acts on the row-stack [pa; pb]."""
    nrow, ncol = BATCH * P2, BATCH * P1
    sel = np.zeros((2 * nrow, 2 * ncol), np.float32)
    for r in range(nrow):
        t, b = r // BATCH, r % BATCH
        base = b * P1 + 4 * t
        if t > 0:                               # left zero-pad of conv2 at t == 0
            sel[r, base - 1] = 1.0              # even position, tap 0   (from pa)
        sel[r, ncol + base] = 1.0               # even position, tap 1   (from pb)
        sel[nrow + r, base + 1] = 1.0           # odd  position, tap 0   (from pa)
        sel[nrow + r, ncol + base + 2] = 1.0    # odd  position, tap 1   (from pb)
    return jnp.asarray(sel)


def prepare_params(p):
    """One-time preprocessing: BN folds, gate reordering, transposes, and packing
    of all constants into one lane-padded f32 slab (+ the SEL matrix)."""
    s0, t0 = bn_fold(p['bn0'])
    s1, t1 = bn_fold(p['conv_bn1'])
    s2, t2 = bn_fold(p['conv_bn2'])
    sl1, tl1 = bn_fold(p['l1_bn'])
    sl2, tl2 = bn_fold(p['l2_bn'])

    # conv1 with bn0 folded in (exact: the wrapper pads the raw input with
    # -t0/s0, so the zero-pad position still contributes 0 after the fold).
    w1 = jnp.concatenate([(p['conv1_w'][:, :, 0] * s0[None, :]).T,
                          (p['conv1_w'][:, :, 1] * s0[None, :]).T], axis=0)      # (2C, F1)
    b1 = p['conv1_b'] + (p['conv1_w'][:, :, 0] + p['conv1_w'][:, :, 1]) @ t0     # (F1,)
    pad_left = -t0 / jnp.where(s0 == 0, 1.0, s0)                                 # (C,)

    # conv2 with bn1 folded: weights scaled by s1; the t1 term becomes per-tap
    # constants added to pa/pb so SEL's zero-pad rows drop them correctly.
    w2a = (p['conv2_w'][:, :, 0] * s1[None, :]).T                                # (F1, F2)
    w2b = (p['conv2_w'][:, :, 1] * s1[None, :]).T
    ca = p['conv2_w'][:, :, 0] @ t1                                              # (F2,)
    cb = p['conv2_w'][:, :, 1] @ t1
    b2 = p['conv2_b']

    # LSTM: gate order [i,f,o,g]; fwd|bwd concatenated along the gate axis;
    # bn2 folded into the layer-0 input weights/bias.
    lp = p['lstm']
    ih = lambda d: _reorder_gates(lp[d]['w_ih']).T                               # (in, 4H)
    hh = lambda d: _reorder_gates(lp[d]['w_hh']).T                               # (H, 4H)
    bb = lambda d: _reorder_gates(lp[d]['b_ih'] + lp[d]['b_hh'])                 # (4H,)
    wih0_raw = jnp.concatenate([ih('f0'), ih('b0')], axis=1)                     # (F2, 8H)
    wih0 = s2[:, None] * wih0_raw
    bg0 = jnp.concatenate([bb('f0'), bb('b0')]) + t2 @ wih0_raw                  # (8H,)
    wih1 = jnp.concatenate([ih('f1'), ih('b1')], axis=1)                         # (2H, 8H)
    bg1 = jnp.concatenate([bb('f1'), bb('b1')])
    whh0 = jnp.concatenate([hh('f0'), hh('b0')], axis=1)                         # (H, 8H)
    whh1 = jnp.concatenate([hh('f1'), hh('b1')], axis=1)

    # GE MLP: l1_bn folded into l2, l2_bn folded into l_out.
    wl1 = p['l1_w'].T                                                            # (G, L1n)
    bl1 = p['l1_b']
    wl2 = sl1[:, None] * p['l2_w'].T                                             # (L1n, L2n)
    bl2 = p['l2_b'] + p['l2_w'] @ tl1
    wo = jnp.concatenate([p['lout_w'][:, :2 * H].T,
                          sl2[:, None] * p['lout_w'][:, 2 * H:].T], axis=0)      # (2H+L2n, 1)
    bo = p['lout_b'] + p['lout_w'][:, 2 * H:] @ tl2                              # (1,)

    dirmask = np.zeros((2 * BATCH, 4 * H), np.float32)
    dirmask[:BATCH] = 1.0

    slab = jnp.zeros((SLAB_ROWS, SLAB_COLS), jnp.float32)

    def put(s, name, val):
        r, nr, nc = SLAB_LAYOUT[name]
        return s.at[r:r + nr, :nc].set(jnp.asarray(val, jnp.float32).reshape(nr, nc))

    for name, val in [('w1', w1), ('w2a', w2a), ('w2b', w2b), ('wih0', wih0),
                      ('wih1', wih1), ('whh0', whh0), ('whh1', whh1),
                      ('wl1', wl1), ('wl2', wl2), ('wo', wo), ('dirmask', dirmask),
                      ('b1', b1), ('ca', ca), ('cb', cb), ('b2', b2),
                      ('bg0', bg0), ('bg1', bg1), ('bl1', bl1), ('bl2', bl2), ('bo', bo)]:
        slab = put(slab, name, val)

    return dict(slab=slab, sel=_build_sel(), pad_left=pad_left)


@jax.jit
def net_forward(prep, x_emb, x_LE, x_GE):
    del x_LE  # unused by the reference forward
    Bn, Cn, _ = x_emb.shape

    # im2col for conv1 on the RAW input (bn0 is folded into the conv1 weights;
    # the left-pad value -t0/s0 keeps the fold exact at the padded position).
    pad_col = jnp.broadcast_to(prep['pad_left'].reshape(1, Cn, 1), (Bn, Cn, 1))
    xp = jnp.concatenate([pad_col, x_emb.astype(jnp.float32)[:, :, :4 * P1 - 1]], axis=2)
    taps = jnp.transpose(xp, (0, 2, 1)).reshape(Bn, P1, 4, Cn)
    cols_e = taps[:, :, 0:2, :].reshape(Bn * P1, 2 * Cn)     # even conv positions
    cols_o = taps[:, :, 2:4, :].reshape(Bn * P1, 2 * Cn)     # odd  conv positions

    # mirrors x_GE.view(B, -1)[:, :27] from the reference
    ge = x_GE.reshape(Bn, -1)[:, :GE_FEATURES].astype(jnp.float32)

    out = pl.pallas_call(
        net_kernel,
        out_shape=jax.ShapeDtypeStruct((Bn, NUM_CLASSES), jnp.float32),
        in_specs=[VMEM_SPEC] * 5,
        out_specs=VMEM_SPEC,
        scratch_shapes=[pltpu.VMEM((T * BATCH, 2 * H), jnp.float32)],
    )(cols_e, cols_o, ge, prep['sel'], prep['slab'])

    # TODO(synk): training-mode BatchNorm (batch stats) and stochastic Dropout are not
    # implemented; this reproduces eval-mode semantics deterministically.
    return {'out': out}


# =============================== params ======================================

def init_params(key):
    ks = iter(jax.random.split(key, 64))

    def nrm(shape, scale=0.1):
        return scale * jax.random.normal(next(ks), shape, jnp.float32)

    def unif(shape, lo, hi):
        return jax.random.uniform(next(ks), shape, jnp.float32, lo, hi)

    def bn(n):
        return dict(gamma=unif((n,), 0.5, 1.5), beta=nrm((n,)),
                    mean=nrm((n,)), var=unif((n,), 0.5, 1.5))

    def lstm_dir(in_size):
        return dict(w_ih=nrm((4 * HIDDEN_SIZE, in_size)),
                    w_hh=nrm((4 * HIDDEN_SIZE, HIDDEN_SIZE)),
                    b_ih=nrm((4 * HIDDEN_SIZE,)),
                    b_hh=nrm((4 * HIDDEN_SIZE,)))

    return {
        'bn0': bn(CHANNELS),
        'conv1_w': nrm((NUM_FILTERS1, CHANNELS, 2)),
        'conv1_b': nrm((NUM_FILTERS1,)),
        'conv_bn1': bn(NUM_FILTERS1),
        'conv2_w': nrm((NUM_FILTERS2, NUM_FILTERS1, 2)),
        'conv2_b': nrm((NUM_FILTERS2,)),
        'conv_bn2': bn(NUM_FILTERS2),
        'lstm': dict(f0=lstm_dir(NUM_FILTERS2), b0=lstm_dir(NUM_FILTERS2),
                     f1=lstm_dir(2 * HIDDEN_SIZE), b1=lstm_dir(2 * HIDDEN_SIZE)),
        'l1_w': nrm((NUM_L1, GE_FEATURES)),
        'l1_b': nrm((NUM_L1,)),
        'l1_bn': bn(NUM_L1),
        'l2_w': nrm((NUM_L2, NUM_L1)),
        'l2_b': nrm((NUM_L2,)),
        'l2_bn': bn(NUM_L2),
        'lout_w': nrm((NUM_CLASSES, 2 * HIDDEN_SIZE + NUM_L2)),
        'lout_b': nrm((NUM_CLASSES,)),
    }


if __name__ == "__main__":
    key = jax.random.PRNGKey(0)
    kp, k1, k2, k3 = jax.random.split(key, 4)
    params = init_params(kp)
    prep = prepare_params(params)   # one-time weight preprocessing (hoisted out of jit)

    # Inputs (float32; the reference placeholders were int32 but BN/conv need float).
    x_emb = jax.random.normal(k1, (BATCH, CHANNELS, DIM_SIZE), jnp.float32)
    x_LE = jax.random.normal(k2, (BATCH, 4), jnp.float32)          # unused by forward
    x_GE = jax.random.normal(k3, (BATCH, GE_FEATURES, DIM_SIZE), jnp.float32)

    out = net_forward(prep, x_emb, x_LE, x_GE)
    jax.block_until_ready(out['out'])
    assert out['out'].shape == (BATCH, NUM_CLASSES)
    assert bool(jnp.all(jnp.isfinite(out['out'])))
    print("KERNEL_OK")
</pallas_src>

<mosaic_0001>
module attributes {stable_mosaic.version = 11 : i64} {
  func.func @net_kernel(%arg0: memref<128x16xf32, #tpu.memory_space<vmem>>, %arg1: memref<128x16xf32, #tpu.memory_space<vmem>>, %arg2: memref<8x8xf32, #tpu.memory_space<vmem>>, %arg3: memref<64x256xf32, #tpu.memory_space<vmem>>, %arg4: memref<176x128xf32, #tpu.memory_space<vmem>>, %arg5: memref<8x1xf32, #tpu.memory_space<vmem>>, %arg6: memref<32x16xf32, #tpu.memory_space<vmem>>) attributes {dimension_semantics = [], scalar_prefetch = 0 : i64, scratch_operands = 1 : i64, tpu.core_type = #tpu.core_type<tc>} {
    %c0 = arith.constant 0 : index
    %c0_0 = arith.constant 0 : index
    %0 = vector.load %arg4[%c0, %c0_0] : memref<176x128xf32, #tpu.memory_space<vmem>>, vector<16x16xf32>
    %c0_1 = arith.constant 0 : index
    %c0_2 = arith.constant 0 : index
    %1 = vector.load %arg0[%c0_1, %c0_2] : memref<128x16xf32, #tpu.memory_space<vmem>>, vector<128x16xf32>
    %cst = arith.constant dense<0.000000e+00> : vector<128x16xf32>
    %2 = tpu.matmul %1, %0, %cst {dimension_numbers = #tpu.dot_dimension_numbers<[1], [0], [0], [1], [0, 0, 1, 1], [], []>} : vector<128x16xf32>, vector<16x16xf32>, vector<128x16xf32> -> vector<128x16xf32>
    %c0_3 = arith.constant 0 : index
    %c0_4 = arith.constant 0 : index
    %3 = vector.load %arg1[%c0_3, %c0_4] : memref<128x16xf32, #tpu.memory_space<vmem>>, vector<128x16xf32>
    %cst_5 = arith.constant dense<0.000000e+00> : vector<128x16xf32>
    %4 = tpu.matmul %3, %0, %cst_5 {dimension_numbers = #tpu.dot_dimension_numbers<[1], [0], [0], [1], [0, 0, 1, 1], [], []>} : vector<128x16xf32>, vector<16x16xf32>, vector<128x16xf32> -> vector<128x16xf32>
    %5 = arith.maximumf %2, %4 : vector<128x16xf32>
    %c160 = arith.constant 160 : index
    %c0_6 = arith.constant 0 : index
    %6 = vector.load %arg4[%c160, %c0_6] : memref<176x128xf32, #tpu.memory_space<vmem>>, vector<1x16xf32>
    %7 = vector.broadcast %6 : vector<1x16xf32> to vector<128x16xf32>
    %8 = arith.addf %5, %7 : vector<128x16xf32>
    %cst_7 = arith.constant 0.000000e+00 : f32
    %9 = vector.broadcast %cst_7 : f32 to vector<128x16xf32>
    %10 = arith.maximumf %8, %9 : vector<128x16xf32>
    %c16 = arith.constant 16 : index
    %c0_8 = arith.constant 0 : index
    %11 = vector.load %arg4[%c16, %c0_8] : memref<176x128xf32, #tpu.memory_space<vmem>>, vector<16x16xf32>
    %cst_9 = arith.constant dense<0.000000e+00> : vector<128x16xf32>
    %12 = tpu.matmul %10, %11, %cst_9 {dimension_numbers = #tpu.dot_dimension_numbers<[1], [0], [0], [1], [0, 0, 1, 1], [], []>} : vector<128x16xf32>, vector<16x16xf32>, vector<128x16xf32> -> vector<128x16xf32>
    %c161 = arith.constant 161 : index
    %c0_10 = arith.constant 0 : index
    %13 = vector.load %arg4[%c161, %c0_10] : memref<176x128xf32, #tpu.memory_space<vmem>>, vector<1x16xf32>
    %14 = vector.broadcast %13 : vector<1x16xf32> to vector<128x16xf32>
    %15 = arith.addf %12, %14 : vector<128x16xf32>
    %c32 = arith.constant 32 : index
    %c0_11 = arith.constant 0 : index
    %16 = vector.load %arg4[%c32, %c0_11] : memref<176x128xf32, #tpu.memory_space<vmem>>, vector<16x16xf32>
    %cst_12 = arith.constant dense<0.000000e+00> : vector<128x16xf32>
    %17 = tpu.matmul %10, %16, %cst_12 {dimension_numbers = #tpu.dot_dimension_numbers<[1], [0], [0], [1], [0, 0, 1, 1], [], []>} : vector<128x16xf32>, vector<16x16xf32>, vector<128x16xf32> -> vector<128x16xf32>
    %c162 = arith.constant 162 : index
    %c0_13 = arith.constant 0 : index
    %18 = vector.load %arg4[%c162, %c0_13] : memref<176x128xf32, #tpu.memory_space<vmem>>, vector<1x16xf32>
    %19 = vector.broadcast %18 : vector<1x16xf32> to vector<128x16xf32>
    %20 = arith.addf %17, %19 : vector<128x16xf32>
    %c0_14 = arith.constant 0 : index
    %c0_15 = arith.constant 0 : index
    %21 = vector.load %arg3[%c0_14, %c0_15] : memref<64x256xf32, #tpu.memory_space<vmem>>, vector<64x256xf32>
    %22 = tpu.concatenate %15, %20 in 0 : vector<128x16xf32>, vector<128x16xf32> -> vector<256x16xf32>
    %cst_16 = arith.constant dense<0.000000e+00> : vector<64x16xf32>
    %23 = tpu.matmul %21, %22, %cst_16 {dimension_numbers = #tpu.dot_dimension_numbers<[1], [0], [0], [1], [0, 0, 1, 1], [], []>} : vector<64x256xf32>, vector<256x16xf32>, vector<64x16xf32> -> vector<64x16xf32>
    %24 = vector.extract_strided_slice %23 {offsets = [0, 0], sizes = [32, 16], strides = [1, 1]} : vector<64x16xf32> to vector<32x16xf32>
    %25 = vector.extract_strided_slice %23 {offsets = [32, 0], sizes = [32, 16], strides = [1, 1]} : vector<64x16xf32> to vector<32x16xf32>
    %26 = arith.maximumf %24, %25 : vector<32x16xf32>
    %c163 = arith.constant 163 : index
    %c0_17 = arith.constant 0 : index
    %27 = vector.load %arg4[%c163, %c0_17] : memref<176x128xf32, #tpu.memory_space<vmem>>, vector<1x16xf32>
    %28 = vector.broadcast %27 : vector<1x16xf32> to vector<32x16xf32>
    %29 = arith.addf %26, %28 : vector<32x16xf32>
    %cst_18 = arith.constant 0.000000e+00 : f32
    %30 = vector.broadcast %cst_18 : f32 to vector<32x16xf32>
    %31 = arith.maximumf %29, %30 : vector<32x16xf32>
    %c144 = arith.constant 144 : index
    %c0_19 = arith.constant 0 : index
    %32 = vector.load %arg4[%c144, %c0_19] : memref<176x128xf32, #tpu.memory_space<vmem>>, vector<16x32xf32>
    %cst_20 = arith.constant 5.000000e-01 : f32
    %33 = vector.broadcast %cst_20 : f32 to vector<16x32xf32>
    %34 = arith.cmpf ogt, %32, %33 : vector<16x32xf32>
    %c48 = arith.constant 48 : index
    %c0_21 = arith.constant 0 : index
    %35 = vector.load %arg4[%c48, %c0_21] : memref<176x128xf32, #tpu.memory_space<vmem>>, vector<16x64xf32>
    %cst_22 = arith.constant dense<0.000000e+00> : vector<32x64xf32>
    %36 = tpu.matmul %31, %35, %cst_22 {dimension_numbers = #tpu.dot_dimension_numbers<[1], [0], [0], [1], [0, 0, 1, 1], [], []>} : vector<32x16xf32>, vector<16x64xf32>, vector<32x64xf32> -> vector<32x64xf32>
    %c164 = arith.constant 164 : index
    %c0_23 = arith.constant 0 : index
    %37 = vector.load %arg4[%c164, %c0_23] : memref<176x128xf32, #tpu.memory_space<vmem>>, vector<1x64xf32>
    %38 = vector.broadcast %37 : vector<1x64xf32> to vector<32x64xf32>
    %39 = arith.addf %36, %38 : vector<32x64xf32>
    %c80 = arith.constant 80 : index
    %c0_24 = arith.constant 0 : index
    %40 = vector.load %arg4[%c80, %c0_24] : memref<176x128xf32, #tpu.memory_space<vmem>>, vector<8x64xf32>
    %41 = vector.extract_strided_slice %39 {offsets = [0, 0], sizes = [8, 32], strides = [1, 1]} : vector<32x64xf32> to vector<8x32xf32>
    %42 = vector.extract_strided_slice %39 {offsets = [24, 32], sizes = [8, 32], strides = [1, 1]} : vector<32x64xf32> to vector<8x32xf32>
    %43 = tpu.concatenate %41, %42 in 0 : vector<8x32xf32>, vector<8x32xf32> -> vector<16x32xf32>
    %44 = vector.extract_strided_slice %39 {offsets = [8, 0], sizes = [8, 32], strides = [1, 1]} : vector<32x64xf32> to vector<8x32xf32>
    %45 = vector.extract_strided_slice %39 {offsets = [16, 32], sizes = [8, 32], strides = [1, 1]} : vector<32x64xf32> to vector<8x32xf32>
    %46 = tpu.concatenate %44, %45 in 0 : vector<8x32xf32>, vector<8x32xf32> -> vector<16x32xf32>
    %47 = vector.extract_strided_slice %39 {offsets = [16, 0], sizes = [8, 32], strides = [1, 1]} : vector<32x64xf32> to vector<8x32xf32>
    %48 = vector.extract_strided_slice %39 {offsets = [8, 32], sizes = [8, 32], strides = [1, 1]} : vector<32x64xf32> to vector<8x32xf32>
    %49 = tpu.concatenate %47, %48 in 0 : vector<8x32xf32>, vector<8x32xf32> -> vector<16x32xf32>
    %50 = vector.extract_strided_slice %39 {offsets = [24, 0], sizes = [8, 32], strides = [1, 1]} : vector<32x64xf32> to vector<8x32xf32>
    %51 = vector.extract_strided_slice %39 {offsets = [0, 32], sizes = [8, 32], strides = [1, 1]} : vector<32x64xf32> to vector<8x32xf32>
    %52 = tpu.concatenate %50, %51 in 0 : vector<8x32xf32>, vector<8x32xf32> -> vector<16x32xf32>
    %53 = vector.extract_strided_slice %43 {offsets = [0, 0], sizes = [16, 24], strides = [1, 1]} : vector<16x32xf32> to vector<16x24xf32>
    %54 = arith.negf %53 : vector<16x24xf32>
    %55 = math.exp %54 : vector<16x24xf32>
    %cst_25 = arith.constant 1.000000e+00 : f32
    %56 = vector.broadcast %cst_25 : f32 to vector<16x24xf32>
    %57 = arith.addf %56, %55 : vector<16x24xf32>
    %58 = arith.divf %56, %57 : vector<16x24xf32>
    %59 = vector.extract_strided_slice %43 {offsets = [0, 24], sizes = [16, 8], strides = [1, 1]} : vector<16x32xf32> to vector<16x8xf32>
    %60 = math.tanh %59 : vector<16x8xf32>
    %61 = vector.extract_strided_slice %58 {offsets = [0, 0], sizes = [16, 8], strides = [1, 1]} : vector<16x24xf32> to vector<16x8xf32>
    %62 = arith.mulf %61, %60 : vector<16x8xf32>
    %63 = vector.extract_strided_slice %58 {offsets = [0, 16], sizes = [16, 8], strides = [1, 1]} : vector<16x24xf32> to vector<16x8xf32>
    %64 = math.tanh %62 : vector<16x8xf32>
    %65 = arith.mulf %63, %64 : vector<16x8xf32>
    %66 = vector.extract_strided_slice %65 {offsets = [0, 0], sizes = [8, 8], strides = [1, 1]} : vector<16x8xf32> to vector<8x8xf32>
    %c0_26 = arith.constant 0 : index
    %c0_27 = arith.constant 0 : index
    %67 = vector.load %arg6[%c0_26, %c0_27] : memref<32x16xf32, #tpu.memory_space<vmem>>, vector<8x8xf32>
    tpu.vector_store %arg6[%c0_26, %c0_27], %66 {strides = array<i32>} : memref<32x16xf32, #tpu.memory_space<vmem>>, vector<8x8xf32>,
    %68 = vector.extract_strided_slice %65 {offsets = [8, 0], sizes = [8, 8], strides = [1, 1]} : vector<16x8xf32> to vector<8x8xf32>
    %c24 = arith.constant 24 : index
    %c8 = arith.constant 8 : index
    %69 = vector.load %arg6[%c24, %c8] : memref<32x16xf32, #tpu.memory_space<vmem>>, vector<8x8xf32>
    tpu.vector_store %arg6[%c24, %c8], %68 {strides = array<i32>} : memref<32x16xf32, #tpu.memory_space<vmem>>, vector<8x8xf32>,
    %cst_28 = arith.constant dense<0.000000e+00> : vector<16x64xf32>
    %70 = tpu.matmul %65, %40, %cst_28 {dimension_numbers = #tpu.dot_dimension_numbers<[1], [0], [0], [1], [0, 0, 1, 1], [], []>} : vector<16x8xf32>, vector<8x64xf32>, vector<16x64xf32> -> vector<16x64xf32>
    %71 = vector.extract_strided_slice %70 {offsets = [0, 0], sizes = [16, 32], strides = [1, 1]} : vector<16x64xf32> to vector<16x32xf32>
    %72 = vector.extract_strided_slice %70 {offsets = [0, 32], sizes = [16, 32], strides = [1, 1]} : vector<16x64xf32> to vector<16x32xf32>
    %73 = arith.select %34, %71, %72 : vector<16x32xi1>, vector<16x32xf32>
    %74 = arith.addf %46, %73 : vector<16x32xf32>
    %75 = vector.extract_strided_slice %74 {offsets = [0, 0], sizes = [16, 24], strides = [1, 1]} : vector<16x32xf32> to vector<16x24xf32>
    %76 = arith.negf %75 : vector<16x24xf32>
    %77 = math.exp %76 : vector<16x24xf32>
    %cst_29 = arith.constant 1.000000e+00 : f32
    %78 = vector.broadcast %cst_29 : f32 to vector<16x24xf32>
    %79 = arith.addf %78, %77 : vector<16x24xf32>
    %80 = arith.divf %78, %79 : vector<16x24xf32>
    %81 = vector.extract_strided_slice %74 {offsets = [0, 24], sizes = [16, 8], strides = [1, 1]} : vector<16x32xf32> to vector<16x8xf32>
    %82 = math.tanh %81 : vector<16x8xf32>
    %83 = vector.extract_strided_slice %80 {offsets = [0, 8], sizes = [16, 8], strides = [1, 1]} : vector<16x24xf32> to vector<16x8xf32>
    %84 = arith.mulf %83, %62 : vector<16x8xf32>
    %85 = vector.extract_strided_slice %80 {offsets = [0, 0], sizes = [16, 8], strides = [1, 1]} : vector<16x24xf32> to vector<16x8xf32>
    %86 = arith.mulf %85, %82 : vector<16x8xf32>
    %87 = arith.addf %84, %86 : vector<16x8xf32>
    %88 = vector.extract_strided_slice %80 {offsets = [0, 16], sizes = [16, 8], strides = [1, 1]} : vector<16x24xf32> to vector<16x8xf32>
    %89 = math.tanh %87 : vector<16x8xf32>
    %90 = arith.mulf %88, %89 : vector<16x8xf32>
    %91 = vector.extract_strided_slice %90 {offsets = [0, 0], sizes = [8, 8], strides = [1, 1]} : vector<16x8xf32> to vector<8x8xf32>
    %c8_30 = arith.constant 8 : index
    %c0_31 = arith.constant 0 : index
    %92 = vector.load %arg6[%c8_30, %c0_31] : memref<32x16xf32, #tpu.memory_space<vmem>>, vector<8x8xf32>
    tpu.vector_store %arg6[%c8_30, %c0_31], %91 {strides = array<i32>} : memref<32x16xf32, #tpu.memory_space<vmem>>, vector<8x8xf32>,
    %93 = vector.extract_strided_slice %90 {offsets = [8, 0], sizes = [8, 8], strides = [1, 1]} : vector<16x8xf32> to vector<8x8xf32>
    %c16_32 = arith.constant 16 : index
    %c8_33 = arith.constant 8 : index
    %94 = vector.load %arg6[%c16_32, %c8_33] : memref<32x16xf32, #tpu.memory_space<vmem>>, vector<8x8xf32>
    tpu.vector_store %arg6[%c16_32, %c8_33], %93 {strides = array<i32>} : memref<32x16xf32, #tpu.memory_space<vmem>>, vector<8x8xf32>,
    %cst_34 = arith.constant dense<0.000000e+00> : vector<16x64xf32>
    %95 = tpu.matmul %90, %40, %cst_34 {dimension_numbers = #tpu.dot_dimension_numbers<[1], [0], [0], [1], [0, 0, 1, 1], [], []>} : vector<16x8xf32>, vector<8x64xf32>, vector<16x64xf32> -> vector<16x64xf32>
    %96 = vector.extract_strided_slice %95 {offsets = [0, 0], sizes = [16, 32], strides = [1, 1]} : vector<16x64xf32> to vector<16x32xf32>
    %97 = vector.extract_strided_slice %95 {offsets = [0, 32], sizes = [16, 32], strides = [1, 1]} : vector<16x64xf32> to vector<16x32xf32>
    %98 = arith.select %34, %96, %97 : vector<16x32xi1>, vector<16x32xf32>
    %99 = arith.addf %49, %98 : vector<16x32xf32>
    %100 = vector.extract_strided_slice %99 {offsets = [0, 0], sizes = [16, 24], strides = [1, 1]} : vector<16x32xf32> to vector<16x24xf32>
    %101 = arith.negf %100 : vector<16x24xf32>
    %102 = math.exp %101 : vector<16x24xf32>
    %cst_35 = arith.constant 1.000000e+00 : f32
    %103 = vector.broadcast %cst_35 : f32 to vector<16x24xf32>
    %104 = arith.addf %103, %102 : vector<16x24xf32>
    %105 = arith.divf %103, %104 : vector<16x24xf32>
    %106 = vector.extract_strided_slice %99 {offsets = [0, 24], sizes = [16, 8], strides = [1, 1]} : vector<16x32xf32> to vector<16x8xf32>
    %107 = math.tanh %106 : vector<16x8xf32>
    %108 = vector.extract_strided_slice %105 {offsets = [0, 8], sizes = [16, 8], strides = [1, 1]} : vector<16x24xf32> to vector<16x8xf32>
    %109 = arith.mulf %108, %87 : vector<16x8xf32>
    %110 = vector.extract_strided_slice %105 {offsets = [0, 0], sizes = [16, 8], strides = [1, 1]} : vector<16x24xf32> to vector<16x8xf32>
    %111 = arith.mulf %110, %107 : vector<16x8xf32>
    %112 = arith.addf %109, %111 : vector<16x8xf32>
    %113 = vector.extract_strided_slice %105 {offsets = [0, 16], sizes = [16, 8], strides = [1, 1]} : vector<16x24xf32> to vector<16x8xf32>
    %114 = math.tanh %112 : vector<16x8xf32>
    %115 = arith.mulf %113, %114 : vector<16x8xf32>
    %116 = vector.extract_strided_slice %115 {offsets = [0, 0], sizes = [8, 8], strides = [1, 1]} : vector<16x8xf32> to vector<8x8xf32>
    %c16_36 = arith.constant 16 : index
    %c0_37 = arith.constant 0 : index
    %117 = vector.load %arg6[%c16_36, %c0_37] : memref<32x16xf32, #tpu.memory_space<vmem>>, vector<8x8xf32>
    tpu.vector_store %arg6[%c16_36, %c0_37], %116 {strides = array<i32>} : memref<32x16xf32, #tpu.memory_space<vmem>>, vector<8x8xf32>,
    %118 = vector.extract_strided_slice %115 {offsets = [8, 0], sizes = [8, 8], strides = [1, 1]} : vector<16x8xf32> to vector<8x8xf32>
    %c8_38 = arith.constant 8 : index
    %c8_39 = arith.constant 8 : index
    %119 = vector.load %arg6[%c8_38, %c8_39] : memref<32x16xf32, #tpu.memory_space<vmem>>, vector<8x8xf32>
    tpu.vector_store %arg6[%c8_38, %c8_39], %118 {strides = array<i32>} : memref<32x16xf32, #tpu.memory_space<vmem>>, vector<8x8xf32>,
    %cst_40 = arith.constant dense<0.000000e+00> : vector<16x64xf32>
    %120 = tpu.matmul %115, %40, %cst_40 {dimension_numbers = #tpu.dot_dimension_numbers<[1], [0], [0], [1], [0, 0, 1, 1], [], []>} : vector<16x8xf32>, vector<8x64xf32>, vector<16x64xf32> -> vector<16x64xf32>
    %121 = vector.extract_strided_slice %120 {offsets = [0, 0], sizes = [16, 32], strides = [1, 1]} : vector<16x64xf32> to vector<16x32xf32>
    %122 = vector.extract_strided_slice %120 {offsets = [0, 32], sizes = [16, 32], strides = [1, 1]} : vector<16x64xf32> to vector<16x32xf32>
    %123 = arith.select %34, %121, %122 : vector<16x32xi1>, vector<16x32xf32>
    %124 = arith.addf %52, %123 : vector<16x32xf32>
    %125 = vector.extract_strided_slice %124 {offsets = [0, 0], sizes = [16, 24], strides = [1, 1]} : vector<16x32xf32> to vector<16x24xf32>
    %126 = arith.negf %125 : vector<16x24xf32>
    %127 = math.exp %126 : vector<16x24xf32>
    %cst_41 = arith.constant 1.000000e+00 : f32
    %128 = vector.broadcast %cst_41 : f32 to vector<16x24xf32>
    %129 = arith.addf %128, %127 : vector<16x24xf32>
    %130 = arith.divf %128, %129 : vector<16x24xf32>
    %131 = vector.extract_strided_slice %124 {offsets = [0, 24], sizes = [16, 8], strides = [1, 1]} : vector<16x32xf32> to vector<16x8xf32>
    %132 = math.tanh %131 : vector<16x8xf32>
    %133 = vector.extract_strided_slice %130 {offsets = [0, 8], sizes = [16, 8], strides = [1, 1]} : vector<16x24xf32> to vector<16x8xf32>
    %134 = arith.mulf %133, %112 : vector<16x8xf32>
    %135 = vector.extract_strided_slice %130 {offsets = [0, 0], sizes = [16, 8], strides = [1, 1]} : vector<16x24xf32> to vector<16x8xf32>
    %136 = arith.mulf %135, %132 : vector<16x8xf32>
    %137 = arith.addf %134, %136 : vector<16x8xf32>
    %138 = vector.extract_strided_slice %130 {offsets = [0, 16], sizes = [16, 8], strides = [1, 1]} : vector<16x24xf32> to vector<16x8xf32>
    %139 = math.tanh %137 : vector<16x8xf32>
    %140 = arith.mulf %138, %139 : vector<16x8xf32>
    %141 = vector.extract_strided_slice %140 {offsets = [0, 0], sizes = [8, 8], strides = [1, 1]} : vector<16x8xf32> to vector<8x8xf32>
    %c24_42 = arith.constant 24 : index
    %c0_43 = arith.constant 0 : index
    %142 = vector.load %arg6[%c24_42, %c0_43] : memref<32x16xf32, #tpu.memory_space<vmem>>, vector<8x8xf32>
    tpu.vector_store %arg6[%c24_42, %c0_43], %141 {strides = array<i32>} : memref<32x16xf32, #tpu.memory_space<vmem>>, vector<8x8xf32>,
    %143 = vector.extract_strided_slice %140 {offsets = [8, 0], sizes = [8, 8], strides = [1, 1]} : vector<16x8xf32> to vector<8x8xf32>
    %c0_44 = arith.constant 0 : index
    %c8_45 = arith.constant 8 : index
    %144 = vector.load %arg6[%c0_44, %c8_45] : memref<32x16xf32, #tpu.memory_space<vmem>>, vector<8x8xf32>
    tpu.vector_store %arg6[%c0_44, %c8_45], %143 {strides = array<i32>} : memref<32x16xf32, #tpu.memory_space<vmem>>, vector<8x8xf32>,
    %c0_46 = arith.constant 0 : index
    %c0_47 = arith.constant 0 : index
    %145 = vector.load %arg6[%c0_46, %c0_47] : memref<32x16xf32, #tpu.memory_space<vmem>>, vector<32x16xf32>
    %c64 = arith.constant 64 : index
    %c0_48 = arith.constant 0 : index
    %146 = vector.load %arg4[%c64, %c0_48] : memref<176x128xf32, #tpu.memory_space<vmem>>, vector<16x64xf32>
    %cst_49 = arith.constant dense<0.000000e+00> : vector<32x64xf32>
    %147 = tpu.matmul %145, %146, %cst_49 {dimension_numbers = #tpu.dot_dimension_numbers<[1], [0], [0], [1], [0, 0, 1, 1], [], []>} : vector<32x16xf32>, vector<16x64xf32>, vector<32x64xf32> -> vector<32x64xf32>
    %c165 = arith.constant 165 : index
    %c0_50 = arith.constant 0 : index
    %148 = vector.load %arg4[%c165, %c0_50] : memref<176x128xf32, #tpu.memory_space<vmem>>, vector<1x64xf32>
    %149 = vector.broadcast %148 : vector<1x64xf32> to vector<32x64xf32>
    %150 = arith.addf %147, %149 : vector<32x64xf32>
    %c88 = arith.constant 88 : index
    %c0_51 = arith.constant 0 : index
    %151 = vector.load %arg4[%c88, %c0_51] : memref<176x128xf32, #tpu.memory_space<vmem>>, vector<8x64xf32>
    %152 = vector.extract_strided_slice %150 {offsets = [0, 0], sizes = [8, 32], strides = [1, 1]} : vector<32x64xf32> to vector<8x32xf32>
    %153 = vector.extract_strided_slice %150 {offsets = [24, 32], sizes = [8, 32], strides = [1, 1]} : vector<32x64xf32> to vector<8x32xf32>
    %154 = tpu.concatenate %152, %153 in 0 : vector<8x32xf32>, vector<8x32xf32> -> vector<16x32xf32>
    %155 = vector.extract_strided_slice %150 {offsets = [8, 0], sizes = [8, 32], strides = [1, 1]} : vector<32x64xf32> to vector<8x32xf32>
    %156 = vector.extract_strided_slice %150 {offsets = [16, 32], sizes = [8, 32], strides = [1, 1]} : vector<32x64xf32> to vector<8x32xf32>
    %157 = tpu.concatenate %155, %156 in 0 : vector<8x32xf32>, vector<8x32xf32> -> vector<16x32xf32>
    %158 = vector.extract_strided_slice %150 {offsets = [16, 0], sizes = [8, 32], strides = [1, 1]} : vector<32x64xf32> to vector<8x32xf32>
    %159 = vector.extract_strided_slice %150 {offsets = [8, 32], sizes = [8, 32], strides = [1, 1]} : vector<32x64xf32> to vector<8x32xf32>
    %160 = tpu.concatenate %158, %159 in 0 : vector<8x32xf32>, vector<8x32xf32> -> vector<16x32xf32>
    %161 = vector.extract_strided_slice %150 {offsets = [24, 0], sizes = [8, 32], strides = [1, 1]} : vector<32x64xf32> to vector<8x32xf32>
    %162 = vector.extract_strided_slice %150 {offsets = [0, 32], sizes = [8, 32], strides = [1, 1]} : vector<32x64xf32> to vector<8x32xf32>
    %163 = tpu.concatenate %161, %162 in 0 : vector<8x32xf32>, vector<8x32xf32> -> vector<16x32xf32>
    %164 = vector.extract_strided_slice %154 {offsets = [0, 0], sizes = [16, 24], strides = [1, 1]} : vector<16x32xf32> to vector<16x24xf32>
    %165 = arith.negf %164 : vector<16x24xf32>
    %166 = math.exp %165 : vector<16x24xf32>
    %cst_52 = arith.constant 1.000000e+00 : f32
    %167 = vector.broadcast %cst_52 : f32 to vector<16x24xf32>
    %168 = arith.addf %167, %166 : vector<16x24xf32>
    %169 = arith.divf %167, %168 : vector<16x24xf32>
    %170 = vector.extract_strided_slice %154 {offsets = [0, 24], sizes = [16, 8], strides = [1, 1]} : vector<16x32xf32> to vector<16x8xf32>
    %171 = math.tanh %170 : vector<16x8xf32>
    %172 = vector.extract_strided_slice %169 {offsets = [0, 0], sizes = [16, 8], strides = [1, 1]} : vector<16x24xf32> to vector<16x8xf32>
    %173 = arith.mulf %172, %171 : vector<16x8xf32>
    %174 = vector.extract_strided_slice %169 {offsets = [0, 16], sizes = [16, 8], strides = [1, 1]} : vector<16x24xf32> to vector<16x8xf32>
    %175 = math.tanh %173 : vector<16x8xf32>
    %176 = arith.mulf %174, %175 : vector<16x8xf32>
    %cst_53 = arith.constant dense<0.000000e+00> : vector<16x64xf32>
    %177 = tpu.matmul %176, %151, %cst_53 {dimension_numbers = #tpu.dot_dimension_numbers<[1], [0], [0], [1], [0, 0, 1, 1], [], []>} : vector<16x8xf32>, vector<8x64xf32>, vector<16x64xf32> -> vector<16x64xf32>
    %178 = vector.extract_strided_slice %177 {offsets = [0, 0], sizes = [16, 32], strides = [1, 1]} : vector<16x64xf32> to vector<16x32xf32>
    %179 = vector.extract_strided_slice %177 {offsets = [0, 32], sizes = [16, 32], strides = [1, 1]} : vector<16x64xf32> to vector<16x32xf32>
    %180 = arith.select %34, %178, %179 : vector<16x32xi1>, vector<16x32xf32>
    %181 = arith.addf %157, %180 : vector<16x32xf32>
    %182 = vector.extract_strided_slice %181 {offsets = [0, 0], sizes = [16, 24], strides = [1, 1]} : vector<16x32xf32> to vector<16x24xf32>
    %183 = arith.negf %182 : vector<16x24xf32>
    %184 = math.exp %183 : vector<16x24xf32>
    %cst_54 = arith.constant 1.000000e+00 : f32
    %185 = vector.broadcast %cst_54 : f32 to vector<16x24xf32>
    %186 = arith.addf %185, %184 : vector<16x24xf32>
    %187 = arith.divf %185, %186 : vector<16x24xf32>
    %188 = vector.extract_strided_slice %181 {offsets = [0, 24], sizes = [16, 8], strides = [1, 1]} : vector<16x32xf32> to vector<16x8xf32>
    %189 = math.tanh %188 : vector<16x8xf32>
    %190 = vector.extract_strided_slice %187 {offsets = [0, 8], sizes = [16, 8], strides = [1, 1]} : vector<16x24xf32> to vector<16x8xf32>
    %191 = arith.mulf %190, %173 : vector<16x8xf32>
    %192 = vector.extract_strided_slice %187 {offsets = [0, 0], sizes = [16, 8], strides = [1, 1]} : vector<16x24xf32> to vector<16x8xf32>
    %193 = arith.mulf %192, %189 : vector<16x8xf32>
    %194 = arith.addf %191, %193 : vector<16x8xf32>
    %195 = vector.extract_strided_slice %187 {offsets = [0, 16], sizes = [16, 8], strides = [1, 1]} : vector<16x24xf32> to vector<16x8xf32>
    %196 = math.tanh %194 : vector<16x8xf32>
    %197 = arith.mulf %195, %196 : vector<16x8xf32>
    %cst_55 = arith.constant dense<0.000000e+00> : vector<16x64xf32>
    %198 = tpu.matmul %197, %151, %cst_55 {dimension_numbers = #tpu.dot_dimension_numbers<[1], [0], [0], [1], [0, 0, 1, 1], [], []>} : vector<16x8xf32>, vector<8x64xf32>, vector<16x64xf32> -> vector<16x64xf32>
    %199 = vector.extract_strided_slice %198 {offsets = [0, 0], sizes = [16, 32], strides = [1, 1]} : vector<16x64xf32> to vector<16x32xf32>
    %200 = vector.extract_strided_slice %198 {offsets = [0, 32], sizes = [16, 32], strides = [1, 1]} : vector<16x64xf32> to vector<16x32xf32>
    %201 = arith.select %34, %199, %200 : vector<16x32xi1>, vector<16x32xf32>
    %202 = arith.addf %160, %201 : vector<16x32xf32>
    %203 = vector.extract_strided_slice %202 {offsets = [0, 0], sizes = [16, 24], strides = [1, 1]} : vector<16x32xf32> to vector<16x24xf32>
    %204 = arith.negf %203 : vector<16x24xf32>
    %205 = math.exp %204 : vector<16x24xf32>
    %cst_56 = arith.constant 1.000000e+00 : f32
    %206 = vector.broadcast %cst_56 : f32 to vector<16x24xf32>
    %207 = arith.addf %206, %205 : vector<16x24xf32>
    %208 = arith.divf %206, %207 : vector<16x24xf32>
    %209 = vector.extract_strided_slice %202 {offsets = [0, 24], sizes = [16, 8], strides = [1, 1]} : vector<16x32xf32> to vector<16x8xf32>
    %210 = math.tanh %209 : vector<16x8xf32>
    %211 = vector.extract_strided_slice %208 {offsets = [0, 8], sizes = [16, 8], strides = [1, 1]} : vector<16x24xf32> to vector<16x8xf32>
    %212 = arith.mulf %211, %194 : vector<16x8xf32>
    %213 = vector.extract_strided_slice %208 {offsets = [0, 0], sizes = [16, 8], strides = [1, 1]} : vector<16x24xf32> to vector<16x8xf32>
    %214 = arith.mulf %213, %210 : vector<16x8xf32>
    %215 = arith.addf %212, %214 : vector<16x8xf32>
    %216 = vector.extract_strided_slice %208 {offsets = [0, 16], sizes = [16, 8], strides = [1, 1]} : vector<16x24xf32> to vector<16x8xf32>
    %217 = math.tanh %215 : vector<16x8xf32>
    %218 = arith.mulf %216, %217 : vector<16x8xf32>
    %cst_57 = arith.constant dense<0.000000e+00> : vector<16x64xf32>
    %219 = tpu.matmul %218, %151, %cst_57 {dimension_numbers = #tpu.dot_dimension_numbers<[1], [0], [0], [1], [0, 0, 1, 1], [], []>} : vector<16x8xf32>, vector<8x64xf32>, vector<16x64xf32> -> vector<16x64xf32>
    %220 = vector.extract_strided_slice %219 {offsets = [0, 0], sizes = [16, 32], strides = [1, 1]} : vector<16x64xf32> to vector<16x32xf32>
    %221 = vector.extract_strided_slice %219 {offsets = [0, 32], sizes = [16, 32], strides = [1, 1]} : vector<16x64xf32> to vector<16x32xf32>
    %222 = arith.select %34, %220, %221 : vector<16x32xi1>, vector<16x32xf32>
    %223 = arith.addf %163, %222 : vector<16x32xf32>
    %224 = vector.extract_strided_slice %223 {offsets = [0, 0], sizes = [16, 24], strides = [1, 1]} : vector<16x32xf32> to vector<16x24xf32>
    %225 = arith.negf %224 : vector<16x24xf32>
    %226 = math.exp %225 : vector<16x24xf32>
    %cst_58 = arith.constant 1.000000e+00 : f32
    %227 = vector.broadcast %cst_58 : f32 to vector<16x24xf32>
    %228 = arith.addf %227, %226 : vector<16x24xf32>
    %229 = arith.divf %227, %228 : vector<16x24xf32>
    %230 = vector.extract_strided_slice %223 {offsets = [0, 24], sizes = [16, 8], strides = [1, 1]} : vector<16x32xf32> to vector<16x8xf32>
    %231 = math.tanh %230 : vector<16x8xf32>
    %232 = vector.extract_strided_slice %229 {offsets = [0, 8], sizes = [16, 8], strides = [1, 1]} : vector<16x24xf32> to vector<16x8xf32>
    %233 = arith.mulf %232, %215 : vector<16x8xf32>
    %234 = vector.extract_strided_slice %229 {offsets = [0, 0], sizes = [16, 8], strides = [1, 1]} : vector<16x24xf32> to vector<16x8xf32>
    %235 = arith.mulf %234, %231 : vector<16x8xf32>
    %236 = arith.addf %233, %235 : vector<16x8xf32>
    %237 = vector.extract_strided_slice %229 {offsets = [0, 16], sizes = [16, 8], strides = [1, 1]} : vector<16x24xf32> to vector<16x8xf32>
    %238 = math.tanh %236 : vector<16x8xf32>
    %239 = arith.mulf %237, %238 : vector<16x8xf32>
    %240 = vector.extract_strided_slice %239 {offsets = [0, 0], sizes = [8, 8], strides = [1, 1]} : vector<16x8xf32> to vector<8x8xf32>
    %241 = vector.extract_strided_slice %239 {offsets = [8, 0], sizes = [8, 8], strides = [1, 1]} : vector<16x8xf32> to vector<8x8xf32>
    %242 = tpu.concatenate %240, %241 in 1 : vector<8x8xf32>, vector<8x8xf32> -> vector<8x16xf32>
    %c0_59 = arith.constant 0 : index
    %c0_60 = arith.constant 0 : index
    %243 = vector.load %arg2[%c0_59, %c0_60] : memref<8x8xf32, #tpu.memory_space<vmem>>, vector<8x8xf32>
    %c96 = arith.constant 96 : index
    %c0_61 = arith.constant 0 : index
    %244 = vector.load %arg4[%c96, %c0_61] : memref<176x128xf32, #tpu.memory_space<vmem>>, vector<8x16xf32>
    %cst_62 = arith.constant dense<0.000000e+00> : vector<8x16xf32>
    %245 = tpu.matmul %243, %244, %cst_62 {dimension_numbers = #tpu.dot_dimension_numbers<[1], [0], [0], [1], [0, 0, 1, 1], [], []>} : vector<8x8xf32>, vector<8x16xf32>, vector<8x16xf32> -> vector<8x16xf32>
    %c166 = arith.constant 166 : index
    %c0_63 = arith.constant 0 : index
    %246 = vector.load %arg4[%c166, %c0_63] : memref<176x128xf32, #tpu.memory_space<vmem>>, vector<1x16xf32>
    %247 = vector.broadcast %246 : vector<1x16xf32> to vector<8x16xf32>
    %248 = arith.addf %245, %247 : vector<8x16xf32>
    %cst_64 = arith.constant 0.000000e+00 : f32
    %249 = vector.broadcast %cst_64 : f32 to vector<8x16xf32>
    %250 = arith.maximumf %248, %249 : vector<8x16xf32>
    %c104 = arith.constant 104 : index
    %c0_65 = arith.constant 0 : index
    %251 = vector.load %arg4[%c104, %c0_65] : memref<176x128xf32, #tpu.memory_space<vmem>>, vector<16x8xf32>
    %cst_66 = arith.constant dense<0.000000e+00> : vector<8x8xf32>
    %252 = tpu.matmul %250, %251, %cst_66 {dimension_numbers = #tpu.dot_dimension_numbers<[1], [0], [0], [1], [0, 0, 1, 1], [], []>} : vector<8x16xf32>, vector<16x8xf32>, vector<8x8xf32> -> vector<8x8xf32>
    %c167 = arith.constant 167 : index
    %c0_67 = arith.constant 0 : index
    %253 = vector.load %arg4[%c167, %c0_67] : memref<176x128xf32, #tpu.memory_space<vmem>>, vector<1x8xf32>
    %254 = vector.broadcast %253 : vector<1x8xf32> to vector<8x8xf32>
    %255 = arith.addf %252, %254 : vector<8x8xf32>
    %cst_68 = arith.constant 0.000000e+00 : f32
    %256 = vector.broadcast %cst_68 : f32 to vector<8x8xf32>
    %257 = arith.maximumf %255, %256 : vector<8x8xf32>
    %258 = tpu.concatenate %242, %257 in 1 : vector<8x16xf32>, vector<8x8xf32> -> vector<8x24xf32>
    %c120 = arith.constant 120 : index
    %c0_69 = arith.constant 0 : index
    %259 = vector.load %arg4[%c120, %c0_69] : memref<176x128xf32, #tpu.memory_space<vmem>>, vector<24x1xf32>
    %cst_70 = arith.constant dense<0.000000e+00> : vector<8x1xf32>
    %260 = tpu.matmul %258, %259, %cst_70 {dimension_numbers = #tpu.dot_dimension_numbers<[1], [0], [0], [1], [0, 0, 1, 1], [], []>} : vector<8x24xf32>, vector<24x1xf32>, vector<8x1xf32> -> vector<8x1xf32>
    %c168 = arith.constant 168 : index
    %c0_71 = arith.constant 0 : index
    %261 = vector.load %arg4[%c168, %c0_71] : memref<176x128xf32, #tpu.memory_space<vmem>>, vector<1x1xf32>
    %262 = vector.broadcast %261 : vector<1x1xf32> to vector<8x1xf32>
    %263 = arith.addf %260, %262 : vector<8x1xf32>
    %264 = arith.negf %263 : vector<8x1xf32>
    %265 = math.exp %264 : vector<8x1xf32>
    %cst_72 = arith.constant 1.000000e+00 : f32
    %266 = vector.broadcast %cst_72 : f32 to vector<8x1xf32>
    %267 = arith.addf %266, %265 : vector<8x1xf32>
    %268 = arith.divf %266, %267 : vector<8x1xf32>
    %c0_73 = arith.constant 0 : index
    %c0_74 = arith.constant 0 : index
    %269 = vector.load %arg5[%c0_73, %c0_74] : memref<8x1xf32, #tpu.memory_space<vmem>>, vector<8x1xf32>
    tpu.vector_store %arg5[%c0_73, %c0_74], %268 {strides = array<i32>} : memref<8x1xf32, #tpu.memory_space<vmem>>, vector<8x1xf32>,
    return
  }
}

</mosaic_0001>

<llo_original>
// kernel: net_forward.1
$region0: #{net_forward.1}
  #allocation0 [shape = 'u32[]', space=smem, size = 0x4, offset = 0x4, fixed_abs, tag = 'smem constant byte address 0x4 - core index']
  #allocation1 [shape = 'u32[144,128]{1,0:T(1,128)}', space=vmem, size = 0x12000, scoped, tag = 'internal scratch']
  #allocation2 [shape = 'f32[32,16]{1,0:T(8,128)}', space=vmem, size = 0x4000, scoped, tag = 'scratch operand']
  %s0 = inlined_call_operand.vmem [shape: f32[128,16], index: 0, kind: input, shape index: {}]
  %s1 = inlined_call_operand.vmem [shape: f32[128,16], index: 1, kind: input, shape index: {}]
  %s2 = inlined_call_operand.vmem [shape: f32[8,8], index: 2, kind: input, shape index: {}]
  %s3 = inlined_call_operand.vmem [shape: f32[64,256], index: 3, kind: input, shape index: {}]
  %s4 = inlined_call_operand.vmem [shape: f32[176,128], index: 4, kind: input, shape index: {}]
  %s5 = inlined_call_operand.vmem [shape: f32[8,1], index: 5, kind: output, shape index: {}]
  %s6 = sld [smem:[#allocation0]]
  $region30: #{net_forward.1} parent=0
    _
  %s8 = ssub.s32 1, %s6
  %s9 = scalar_select 0, %s8, %s6
  // Predicated region
  $region2: #{net_forward.1} parent=0 // pred_check
    _
  $region3: #{net_forward.1} parent=0 // pred_check_branch
    %11 = sbr.rel (0) target = $region5
  $region4: #{net_forward.1} parent=0 // pred_region
    _
  $region5: #{net_forward.1} parent=0 // pred_fallthru
    _
  // Predicated region
  $region6: #{net_forward.1} parent=0 // pred_check
    _
  $region7: #{net_forward.1} parent=0 // pred_check_branch
    %13 = sbr.rel (0) target = $region9
  $region8: #{net_forward.1} parent=0 // pred_region
    _
  $region9: #{net_forward.1} parent=0 // pred_fallthru
    _
  // Predicated region
  $region10: #{net_forward.1} parent=0 // pred_check
    _
  $region11: #{net_forward.1} parent=0 // pred_check_branch
    %15 = sbr.rel (0) target = $region13
  $region12: #{net_forward.1} parent=0 // pred_region
    _
  $region13: #{net_forward.1} parent=0 // pred_fallthru
    _
  // Predicated region
  $region14: #{net_forward.1} parent=0 // pred_check
    _
  $region15: #{net_forward.1} parent=0 // pred_check_branch
    %17 = sbr.rel (0) target = $region17
  $region16: #{net_forward.1} parent=0 // pred_region
    _
  $region17: #{net_forward.1} parent=0 // pred_fallthru
    _
  // Predicated region
  $region18: #{net_forward.1} parent=0 // pred_check
    _
  $region19: #{net_forward.1} parent=0 // pred_check_branch
    %19 = sbr.rel (0) target = $region21
  $region20: #{net_forward.1} parent=0 // pred_region
    _
  $region21: #{net_forward.1} parent=0 // pred_fallthru
    _
  %v20 = vld [vmem:[%s4] sm:$0xff]
  %v21 = vld [vmem:[%s4 + $0x8] sm:$0xff]
  %v22 = vld [vmem:[%s0] sm:$0xff]
  %v23 = vld [vmem:[%s0 + $0x8] sm:$0xff]
  %v24 = vld [vmem:[%s0 + $0x10] sm:$0xff]
  %v25 = vld [vmem:[%s0 + $0x18] sm:$0xff]
  %v26 = vld [vmem:[%s0 + $0x20] sm:$0xff]
  %v27 = vld [vmem:[%s0 + $0x28] sm:$0xff]
  %v28 = vld [vmem:[%s0 + $0x30] sm:$0xff]
  %v29 = vld [vmem:[%s0 + $0x38] sm:$0xff]
  %v30 = vld [vmem:[%s0 + $0x40] sm:$0xff]
  %v31 = vld [vmem:[%s0 + $0x48] sm:$0xff]
  %v32 = vld [vmem:[%s0 + $0x50] sm:$0xff]
  %v33 = vld [vmem:[%s0 + $0x58] sm:$0xff]
  %v34 = vld [vmem:[%s0 + $0x60] sm:$0xff]
  %v35 = vld [vmem:[%s0 + $0x68] sm:$0xff]
  %v36 = vld [vmem:[%s0 + $0x70] sm:$0xff]
  %v37 = vld [vmem:[%s0 + $0x78] sm:$0xff]
  %vm38 = vcmask 130048
  %v40 = vsel %vm38, %v22, 0
  %v43 = vsel %vm38, %v23, 0
  %v46 = vsel %vm38, %v24, 0
  %v49 = vsel %vm38, %v25, 0
  %v52 = vsel %vm38, %v26, 0
  %v55 = vsel %vm38, %v27, 0
  %v58 = vsel %vm38, %v28, 0
  %v61 = vsel %vm38, %v29, 0
  %v64 = vsel %vm38, %v30, 0
  %v67 = vsel %vm38, %v31, 0
  %v70 = vsel %vm38, %v32, 0
  %v73 = vsel %vm38, %v33, 0
  %v76 = vsel %vm38, %v34, 0
  %v79 = vsel %vm38, %v35, 0
  %v82 = vsel %vm38, %v36, 0
  %v85 = vsel %vm38, %v37, 0
  %87 = vmatprep.subr.mxu0 0.0
  %88 = vmatpush1.msra.mxu0 %v20
  %89 = vmatprep.subr.mxu0 0.0
  %90 = vmatpush1.msra.mxu0 %v21
  %91 = vmatprep.subr.mxu0 0.0
  %92 = vmatpush1.msra.mxu0 0.0
  %93 = vmatprep.subr.mxu0 0.0
  %94 = vmatpush1.msra.mxu0 0.0
  %95 = vmatprep.subr.mxu0 0.0
  %96 = vmatpush1.msra.mxu0 0.0
  %97 = vmatprep.subr.mxu0 0.0
  %98 = vmatpush1.msra.mxu0 0.0
  %99 = vmatprep.subr.mxu0 0.0
  %100 = vmatpush1.msra.mxu0 0.0
  %101 = vmatprep.subr.mxu0 0.0
  %102 = vmatpush1.msra.mxu0 0.0
  %103 = vmatprep.subr.mxu0 0.0
  %104 = vmatpush1.msra.mxu0 0.0
  %105 = vmatprep.subr.mxu0 0.0
  %106 = vmatpush1.msra.mxu0 0.0
  %107 = vmatprep.subr.mxu0 0.0
  %108 = vmatpush1.msra.mxu0 0.0
  %109 = vmatprep.subr.mxu0 0.0
  %110 = vmatpush1.msra.mxu0 0.0
  %111 = vmatprep.subr.mxu0 0.0
  %112 = vmatpush1.msra.mxu0 0.0
  %113 = vmatprep.subr.mxu0 0.0
  %114 = vmatpush1.msra.mxu0 0.0
  %115 = vmatprep.subr.mxu0 0.0
  %116 = vmatpush1.msra.mxu0 0.0
  %117 = vmatprep.subr.mxu0 0.0
  %118 = vmatpush1.msra.mxu0 0.0
  %119 = vmatprep.subr.mxu0 0.0
  %120 = vmatpush1.msra.mxu0 0.0
  %121 = vmatprep.subr.mxu0 0.0
  %122 = vmatpush1.msra.mxu0 0.0
  %123 = vmatprep.subr.mxu0 0.0
  %124 = vmatpush1.msra.mxu0 0.0
  %125 = vmatprep.subr.mxu0 0.0
  %126 = vmatpush1.msra.mxu0 0.0
  %127 = vmatprep.subr.mxu0 0.0
  %128 = vmatpush1.msra.mxu0 0.0
  %129 = vmatprep.subr.mxu0 0.0
  %130 = vmatpush1.msra.mxu0 0.0
  %131 = vmatprep.subr.mxu0 0.0
  %132 = vmatpush1.msra.mxu0 0.0
  %133 = vmatprep.subr.mxu0 0.0
  %134 = vmatpush1.msra.mxu0 0.0
  %135 = vmatprep.subr.mxu0 0.0
  %136 = vmatpush1.msra.mxu0 0.0
  %137 = vmatprep.subr.mxu0 0.0
  %138 = vmatpush1.msra.mxu0 0.0
  %139 = vmatprep.subr.mxu0 0.0
  %140 = vmatpush1.msra.mxu0 0.0
  %141 = vmatprep.subr.mxu0 0.0
  %142 = vmatpush1.msra.mxu0 0.0
  %143 = vmatprep.subr.mxu0 0.0
  %144 = vmatpush1.msra.mxu0 0.0
  %145 = vmatprep.subr.mxu0 0.0
  %146 = vmatpush1.msra.mxu0 0.0
  %147 = vmatprep.subr.mxu0 0.0
  %148 = vmatpush1.msra.mxu0 0.0
  %149 = vmatprep.subr.mxu0 0.0
  %150 = vmatpush1.msra.mxu0 0.0
  %151 = vmatprep.mubr.f32.mxu0 0.0
  %152 = vmatmul.mubr.f32.gmra.mrb[0].mxu0 %v40
  %v153 = vpop.f32.mrb[0].mxu0
  %v154 = vadd.f32 0.0, %v153
  %v155 = vpop.f32.mrb[0].mxu0
  %156 = vmatprep.mubr.f32.mxu0 0.0
  %157 = vmatmul.mubr.f32.gmra.mrb[0].mxu0 %v43
  %v158 = vpop.f32.mrb[0].mxu0
  %v159 = vadd.f32 0.0, %v158
  %v160 = vpop.f32.mrb[0].mxu0
  %161 = vmatprep.mubr.f32.mxu0 0.0
  %162 = vmatmul.mubr.f32.gmra.mrb[0].mxu0 %v46
  %v163 = vpop.f32.mrb[0].mxu0
  %v164 = vadd.f32 0.0, %v163
  %v165 = vpop.f32.mrb[0].mxu0
  %166 = vmatprep.mubr.f32.mxu0 0.0
  %167 = vmatmul.mubr.f32.gmra.mrb[0].mxu0 %v49
  %v168 = vpop.f32.mrb[0].mxu0
  %v169 = vadd.f32 0.0, %v168
  %v170 = vpop.f32.mrb[0].mxu0
  %171 = vmatprep.mubr.f32.mxu0 0.0
  %172 = vmatmul.mubr.f32.gmra.mrb[0].mxu0 %v52
  %v173 = vpop.f32.mrb[0].mxu0
  %v174 = vadd.f32 0.0, %v173
  %v175 = vpop.f32.mrb[0].mxu0
  %176 = vmatprep.mubr.f32.mxu0 0.0
  %177 = vmatmul.mubr.f32.gmra.mrb[0].mxu0 %v55
  %v178 = vpop.f32.mrb[0].mxu0
  %v179 = vadd.f32 0.0, %v178
  %v180 = vpop.f32.mrb[0].mxu0
  %181 = vmatprep.mubr.f32.mxu0 0.0
  %182 = vmatmul.mubr.f32.gmra.mrb[0].mxu0 %v58
  %v183 = vpop.f32.mrb[0].mxu0
  %v184 = vadd.f32 0.0, %v183
  %v185 = vpop.f32.mrb[0].mxu0
  %186 = vmatprep.mubr.f32.mxu0 0.0
  %187 = vmatmul.mubr.f32.gmra.mrb[0].mxu0 %v61
  %v188 = vpop.f32.mrb[0].mxu0
  %v189 = vadd.f32 0.0, %v188
  %v190 = vpop.f32.mrb[0].mxu0
  %191 = vmatprep.mubr.f32.mxu0 0.0
  %192 = vmatmul.mubr.f32.gmra.mrb[0].mxu0 %v64
  %v193 = vpop.f32.mrb[0].mxu0
  %v194 = vadd.f32 0.0, %v193
  %v195 = vpop.f32.mrb[0].mxu0
  %196 = vmatprep.mubr.f32.mxu0 0.0
  %197 = vmatmul.mubr.f32.gmra.mrb[0].mxu0 %v67
  %v198 = vpop.f32.mrb[0].mxu0
  %v199 = vadd.f32 0.0, %v198
  %v200 = vpop.f32.mrb[0].mxu0
  %201 = vmatprep.mubr.f32.mxu0 0.0
  %202 = vmatmul.mubr.f32.gmra.mrb[0].mxu0 %v70
  %v203 = vpop.f32.mrb[0].mxu0
  %v204 = vadd.f32 0.0, %v203
  %v205 = vpop.f32.mrb[0].mxu0
  %206 = vmatprep.mubr.f32.mxu0 0.0
  %207 = vmatmul.mubr.f32.gmra.mrb[0].mxu0 %v73
  %v208 = vpop.f32.mrb[0].mxu0
  %v209 = vadd.f32 0.0, %v208
  %v210 = vpop.f32.mrb[0].mxu0
  %211 = vmatprep.mubr.f32.mxu0 0.0
  %212 = vmatmul.mubr.f32.gmra.mrb[0].mxu0 %v76
  %v213 = vpop.f32.mrb[0].mxu0
  %v214 = vadd.f32 0.0, %v213
  %v215 = vpop.f32.mrb[0].mxu0
  %216 = vmatprep.mubr.f32.mxu0 0.0
  %217 = vmatmul.mubr.f32.gmra.mrb[0].mxu0 %v79
  %v218 = vpop.f32.mrb[0].mxu0
  %v219 = vadd.f32 0.0, %v218
  %v220 = vpop.f32.mrb[0].mxu0
  %221 = vmatprep.mubr.f32.mxu0 0.0
  %222 = vmatmul.mubr.f32.gmra.mrb[0].mxu0 %v82
  %v223 = vpop.f32.mrb[0].mxu0
  %v224 = vadd.f32 0.0, %v223
  %v225 = vpop.f32.mrb[0].mxu0
  %226 = vmatprep.mubr.f32.mxu0 0.0
  %227 = vmatmul.mubr.f32.gmra.mrb[0].mxu0 %v85
  %v228 = vpop.f32.mrb[0].mxu0
  %v229 = vadd.f32 0.0, %v228
  %v230 = vpop.f32.mrb[0].mxu0
  %231 = vdwg.mxu0
  %v232 = vld [vmem:[%s1] sm:$0xff]
  %v233 = vld [vmem:[%s1 + $0x8] sm:$0xff]
  %v234 = vld [vmem:[%s1 + $0x10] sm:$0xff]
  %v235 = vld [vmem:[%s1 + $0x18] sm:$0xff]
  %v236 = vld [vmem:[%s1 + $0x20] sm:$0xff]
  %v237 = vld [vmem:[%s1 + $0x28] sm:$0xff]
  %v238 = vld [vmem:[%s1 + $0x30] sm:$0xff]
  %v239 = vld [vmem:[%s1 + $0x38] sm:$0xff]
  %v240 = vld [vmem:[%s1 + $0x40] sm:$0xff]
  %v241 = vld [vmem:[%s1 + $0x48] sm:$0xff]
  %v242 = vld [vmem:[%s1 + $0x50] sm:$0xff]
  %v243 = vld [vmem:[%s1 + $0x58] sm:$0xff]
  %v244 = vld [vmem:[%s1 + $0x60] sm:$0xff]
  %v245 = vld [vmem:[%s1 + $0x68] sm:$0xff]
  %v246 = vld [vmem:[%s1 + $0x70] sm:$0xff]
  %v247 = vld [vmem:[%s1 + $0x78] sm:$0xff]
  %v249 = vsel %vm38, %v232, 0
  %v252 = vsel %vm38, %v233, 0
  %v255 = vsel %vm38, %v234, 0
  %v258 = vsel %vm38, %v235, 0
  %v261 = vsel %vm38, %v236, 0
  %v264 = vsel %vm38, %v237, 0
  %v267 = vsel %vm38, %v238, 0
  %v270 = vsel %vm38, %v239, 0
  %v273 = vsel %vm38, %v240, 0
  %v276 = vsel %vm38, %v241, 0
  %v279 = vsel %vm38, %v242, 0
  %v282 = vsel %vm38, %v243, 0
  %v285 = vsel %vm38, %v244, 0
  %v288 = vsel %vm38, %v245, 0
  %v291 = vsel %vm38, %v246, 0
  %v294 = vsel %vm38, %v247, 0
  %296 = vmatprep.subr.mxu0 0.0
  %297 = vmatpush1.msra.mxu0 %v20
  %298 = vmatprep.subr.mxu0 0.0
  %299 = vmatpush1.msra.mxu0 %v21
  %300 = vmatprep.subr.mxu0 0.0
  %301 = vmatpush1.msra.mxu0 0.0
  %302 = vmatprep.subr.mxu0 0.0
  %303 = vmatpush1.msra.mxu0 0.0
  %304 = vmatprep.subr.mxu0 0.0
  %305 = vmatpush1.msra.mxu0 0.0
  %306 = vmatprep.subr.mxu0 0.0
  %307 = vmatpush1.msra.mxu0 0.0
  %308 = vmatprep.subr.mxu0 0.0
  %309 = vmatpush1.msra.mxu0 0.0
  %310 = vmatprep.subr.mxu0 0.0
  %311 = vmatpush1.msra.mxu0 0.0
  %312 = vmatprep.subr.mxu0 0.0
  %313 = vmatpush1.msra.mxu0 0.0
  %314 = vmatprep.subr.mxu0 0.0
  %315 = vmatpush1.msra.mxu0 0.0
  %316 = vmatprep.subr.mxu0 0.0
  %317 = vmatpush1.msra.mxu0 0.0
  %318 = vmatprep.subr.mxu0 0.0
  %319 = vmatpush1.msra.mxu0 0.0
  %320 = vmatprep.subr.mxu0 0.0
  %321 = vmatpush1.msra.mxu0 0.0
  %322 = vmatprep.subr.mxu0 0.0
  %323 = vmatpush1.msra.mxu0 0.0
  %324 = vmatprep.subr.mxu0 0.0
  %325 = vmatpush1.msra.mxu0 0.0
  %326 = vmatprep.subr.mxu0 0.0
  %327 = vmatpush1.msra.mxu0 0.0
  %328 = vmatprep.subr.mxu0 0.0
  %329 = vmatpush1.msra.mxu0 0.0
  %330 = vmatprep.subr.mxu0 0.0
  %331 = vmatpush1.msra.mxu0 0.0
  %332 = vmatprep.subr.mxu0 0.0
  %333 = vmatpush1.msra.mxu0 0.0
  %334 = vmatprep.subr.mxu0 0.0
  %335 = vmatpush1.msra.mxu0 0.0
  %336 = vmatprep.subr.mxu0 0.0
  %337 = vmatpush1.msra.mxu0 0.0
  %338 = vmatprep.subr.mxu0 0.0
  %339 = vmatpush1.msra.mxu0 0.0
  %340 = vmatprep.subr.mxu0 0.0
  %341 = vmatpush1.msra.mxu0 0.0
  %342 = vmatprep.subr.mxu0 0.0
  %343 = vmatpush1.msra.mxu0 0.0
  %344 = vmatprep.subr.mxu0 0.0
  %345 = vmatpush1.msra.mxu0 0.0
  %346 = vmatprep.subr.mxu0 0.0
  %347 = vmatpush1.msra.mxu0 0.0
  %348 = vmatprep.subr.mxu0 0.0
  %349 = vmatpush1.msra.mxu0 0.0
  %350 = vmatprep.subr.mxu0 0.0
  %351 = vmatpush1.msra.mxu0 0.0
  %352 = vmatprep.subr.mxu0 0.0
  %353 = vmatpush1.msra.mxu0 0.0
  %354 = vmatprep.subr.mxu0 0.0
  %355 = vmatpush1.msra.mxu0 0.0
  %356 = vmatprep.subr.mxu0 0.0
  %357 = vmatpush1.msra.mxu0 0.0
  %358 = vmatprep.subr.mxu0 0.0
  %359 = vmatpush1.msra.mxu0 0.0
  %360 = vmatprep.mubr.f32.mxu0 0.0
  %361 = vmatmul.mubr.f32.gmra.mrb[0].mxu0 %v249
  %v362 = vpop.f32.mrb[0].mxu0
  %v363 = vadd.f32 0.0, %v362
  %v364 = vpop.f32.mrb[0].mxu0
  %365 = vmatprep.mubr.f32.mxu0 0.0
  %366 = vmatmul.mubr.f32.gmra.mrb[0].mxu0 %v252
  %v367 = vpop.f32.mrb[0].mxu0
  %v368 = vadd.f32 0.0, %v367
  %v369 = vpop.f32.mrb[0].mxu0
  %370 = vmatprep.mubr.f32.mxu0 0.0
  %371 = vmatmul.mubr.f32.gmra.mrb[0].mxu0 %v255
  %v372 = vpop.f32.mrb[0].mxu0
  %v373 = vadd.f32 0.0, %v372
  %v374 = vpop.f32.mrb[0].mxu0
  %375 = vmatprep.mubr.f32.mxu0 0.0
  %376 = vmatmul.mubr.f32.gmra.mrb[0].mxu0 %v258
  %v377 = vpop.f32.mrb[0].mxu0
  %v378 = vadd.f32 0.0, %v377
  %v379 = vpop.f32.mrb[0].mxu0
  %380 = vmatprep.mubr.f32.mxu0 0.0
  %381 = vmatmul.mubr.f32.gmra.mrb[0].mxu0 %v261
  %v382 = vpop.f32.mrb[0].mxu0
  %v383 = vadd.f32 0.0, %v382
  %v384 = vpop.f32.mrb[0].mxu0
  %385 = vmatprep.mubr.f32.mxu0 0.0
  %386 = vmatmul.mubr.f32.gmra.mrb[0].mxu0 %v264
  %v387 = vpop.f32.mrb[0].mxu0
  %v388 = vadd.f32 0.0, %v387
  %v389 = vpop.f32.mrb[0].mxu0
  %390 = vmatprep.mubr.f32.mxu0 0.0
  %391 = vmatmul.mubr.f32.gmra.mrb[0].mxu0 %v267
  %v392 = vpop.f32.mrb[0].mxu0
  %v393 = vadd.f32 0.0, %v392
  %v394 = vpop.f32.mrb[0].mxu0
  %395 = vmatprep.mubr.f32.mxu0 0.0
  %396 = vmatmul.mubr.f32.gmra.mrb[0].mxu0 %v270
  %v397 = vpop.f32.mrb[0].mxu0
  %v398 = vadd.f32 0.0, %v397
  %v399 = vpop.f32.mrb[0].mxu0
  %400 = vmatprep.mubr.f32.mxu0 0.0
  %401 = vmatmul.mubr.f32.gmra.mrb[0].mxu0 %v273
  %v402 = vpop.f32.mrb[0].mxu0
  %v403 = vadd.f32 0.0, %v402
  %v404 = vpop.f32.mrb[0].mxu0
  %405 = vmatprep.mubr.f32.mxu0 0.0
  %406 = vmatmul.mubr.f32.gmra.mrb[0].mxu0 %v276
  %v407 = vpop.f32.mrb[0].mxu0
  %v408 = vadd.f32 0.0, %v407
  %v409 = vpop.f32.mrb[0].mxu0
  %410 = vmatprep.mubr.f32.mxu0 0.0
  %411 = vmatmul.mubr.f32.gmra.mrb[0].mxu0 %v279
  %v412 = vpop.f32.mrb[0].mxu0
  %v413 = vadd.f32 0.0, %v412
  %v414 = vpop.f32.mrb[0].mxu0
  %415 = vmatprep.mubr.f32.mxu0 0.0
  %416 = vmatmul.mubr.f32.gmra.mrb[0].mxu0 %v282
  %v417 = vpop.f32.mrb[0].mxu0
  %v418 = vadd.f32 0.0, %v417
  %v419 = vpop.f32.mrb[0].mxu0
  %420 = vmatprep.mubr.f32.mxu0 0.0
  %421 = vmatmul.mubr.f32.gmra.mrb[0].mxu0 %v285
  %v422 = vpop.f32.mrb[0].mxu0
  %v423 = vadd.f32 0.0, %v422
  %v424 = vpop.f32.mrb[0].mxu0
  %425 = vmatprep.mubr.f32.mxu0 0.0
  %426 = vmatmul.mubr.f32.gmra.mrb[0].mxu0 %v288
  %v427 = vpop.f32.mrb[0].mxu0
  %v428 = vadd.f32 0.0, %v427
  %v429 = vpop.f32.mrb[0].mxu0
  %430 = vmatprep.mubr.f32.mxu0 0.0
  %431 = vmatmul.mubr.f32.gmra.mrb[0].mxu0 %v291
  %v432 = vpop.f32.mrb[0].mxu0
  %v433 = vadd.f32 0.0, %v432
  %v434 = vpop.f32.mrb[0].mxu0
  %435 = vmatprep.mubr.f32.mxu0 0.0
  %436 = vmatmul.mubr.f32.gmra.mrb[0].mxu0 %v294
  %v437 = vpop.f32.mrb[0].mxu0
  %v438 = vadd.f32 0.0, %v437
  %v439 = vpop.f32.mrb[0].mxu0
  %440 = vdwg.mxu0
  %v441 = vmax.f32 %v154, %v363
  %v442 = vmax.f32 %v159, %v368
  %v443 = vmax.f32 %v164, %v373
  %v444 = vmax.f32 %v169, %v378
  %v445 = vmax.f32 %v174, %v383
  %v446 = vmax.f32 %v179, %v388
  %v447 = vmax.f32 %v184, %v393
  %v448 = vmax.f32 %v189, %v398
  %v449 = vmax.f32 %v194, %v403
  %v450 = vmax.f32 %v199, %v408
  %v451 = vmax.f32 %v204, %v413
  %v452 = vmax.f32 %v209, %v418
  %v453 = vmax.f32 %v214, %v423
  %v454 = vmax.f32 %v219, %v428
  %v455 = vmax.f32 %v224, %v433
  %v456 = vmax.f32 %v229, %v438
  %v457 = vld [vmem:[%s4 + $0xa0] sm:$0x1]
  %v458 = vlaneseq
  %v459 = vshrl.u32 %v458, 7
  %v460 = vsub.s32 0, %v459
  %v461 = vrot.slane %v457, %v460
  %v462 = vadd.f32 %v441, %v461
  %v463 = vadd.f32 %v442, %v461
  %v464 = vadd.f32 %v443, %v461
  %v465 = vadd.f32 %v444, %v461
  %v466 = vadd.f32 %v445, %v461
  %v467 = vadd.f32 %v446, %v461
  %v468 = vadd.f32 %v447, %v461
  %v469 = vadd.f32 %v448, %v461
  %v470 = vadd.f32 %v449, %v461
  %v471 = vadd.f32 %v450, %v461
  %v472 = vadd.f32 %v451, %v461
  %v473 = vadd.f32 %v452, %v461
  %v474 = vadd.f32 %v453, %v461
  %v475 = vadd.f32 %v454, %v461
  %v476 = vadd.f32 %v455, %v461
  %v477 = vadd.f32 %v456, %v461
  %v478 = vmax.f32 %v462, 0.0
  %v479 = vmax.f32 %v463, 0.0
  %v480 = vmax.f32 %v464, 0.0
  %v481 = vmax.f32 %v465, 0.0
  %v482 = vmax.f32 %v466, 0.0
  %v483 = vmax.f32 %v467, 0.0
  %v484 = vmax.f32 %v468, 0.0
  %v485 = vmax.f32 %v469, 0.0
  %v486 = vmax.f32 %v470, 0.0
  %v487 = vmax.f32 %v471, 0.0
  %v488 = vmax.f32 %v472, 0.0
  %v489 = vmax.f32 %v473, 0.0
  %v490 = vmax.f32 %v474, 0.0
  %v491 = vmax.f32 %v475, 0.0
  %v492 = vmax.f32 %v476, 0.0
  %v493 = vmax.f32 %v477, 0.0
  %v494 = vld [vmem:[%s4 + $0x10] sm:$0xff]
  %v495 = vld [vmem:[%s4 + $0x18] sm:$0xff]
  %v496 = vld [vmem:[%s4 + $0xa1] sm:$0x1]
  %v497 = vlaneseq
  %v498 = vshrl.u32 %v497, 7
  %v499 = vsub.s32 0, %v498
  %v500 = vrot.slane %v496, %v499
  %v502 = vsel %vm38, %v478, 0
  %v505 = vsel %vm38, %v479, 0
  %v508 = vsel %vm38, %v480, 0
  %v511 = vsel %vm38, %v481, 0
  %v514 = vsel %vm38, %v482, 0
  %v517 = vsel %vm38, %v483, 0
  %v520 = vsel %vm38, %v484, 0
  %v523 = vsel %vm38, %v485, 0
  %v526 = vsel %vm38, %v486, 0
  %v529 = vsel %vm38, %v487, 0
  %v532 = vsel %vm38, %v488, 0
  %v535 = vsel %vm38, %v489, 0
  %v538 = vsel %vm38, %v490, 0
  %v541 = vsel %vm38, %v491, 0
  %v544 = vsel %vm38, %v492, 0
  %v547 = vsel %vm38, %v493, 0
  %549 = vmatprep.subr.mxu0 0.0
  %550 = vmatpush1.msra.mxu0 %v494
  %551 = vmatprep.subr.mxu0 0.0
  %552 = vmatpush1.msra.mxu0 %v495
  %553 = vmatprep.subr.mxu0 0.0
  %554 = vmatpush1.msra.mxu0 0.0
  %555 = vmatprep.subr.mxu0 0.0
  %556 = vmatpush1.msra.mxu0 0.0
  %557 = vmatprep.subr.mxu0 0.0
  %558 = vmatpush1.msra.mxu0 0.0
  %559 = vmatprep.subr.mxu0 0.0
  %560 = vmatpush1.msra.mxu0 0.0
  %561 = vmatprep.subr.mxu0 0.0
  %562 = vmatpush1.msra.mxu0 0.0
  %563 = vmatprep.subr.mxu0 0.0
  %564 = vmatpush1.msra.mxu0 0.0
  %565 = vmatprep.subr.mxu0 0.0
  %566 = vmatpush1.msra.mxu0 0.0
  %567 = vmatprep.subr.mxu0 0.0
  %568 = vmatpush1.msra.mxu0 0.0
  %569 = vmatprep.subr.mxu0 0.0
  %570 = vmatpush1.msra.mxu0 0.0
  %571 = vmatprep.subr.mxu0 0.0
  %572 = vmatpush1.msra.mxu0 0.0
  %573 = vmatprep.subr.mxu0 0.0
  %574 = vmatpush1.msra.mxu0 0.0
  %575 = vmatprep.subr.mxu0 0.0
  %576 = vmatpush1.msra.mxu0 0.0
  %577 = vmatprep.subr.mxu0 0.0
  %578 = vmatpush1.msra.mxu0 0.0
  %579 = vmatprep.subr.mxu0 0.0
  %580 = vmatpush1.msra.mxu0 0.0
  %581 = vmatprep.subr.mxu0 0.0
  %582 = vmatpush1.msra.mxu0 0.0
  %583 = vmatprep.subr.mxu0 0.0
  %584 = vmatpush1.msra.mxu0 0.0
  %585 = vmatprep.subr.mxu0 0.0
  %586 = vmatpush1.msra.mxu0 0.0
  %587 = vmatprep.subr.mxu0 0.0
  %588 = vmatpush1.msra.mxu0 0.0
  %589 = vmatprep.subr.mxu0 0.0
  %590 = vmatpush1.msra.mxu0 0.0
  %591 = vmatprep.subr.mxu0 0.0
  %592 = vmatpush1.msra.mxu0 0.0
  %593 = vmatprep.subr.mxu0 0.0
  %594 = vmatpush1.msra.mxu0 0.0
  %595 = vmatprep.subr.mxu0 0.0
  %596 = vmatpush1.msra.mxu0 0.0
  %597 = vmatprep.subr.mxu0 0.0
  %598 = vmatpush1.msra.mxu0 0.0
  %599 = vmatprep.subr.mxu0 0.0
  %600 = vmatpush1.msra.mxu0 0.0
  %601 = vmatprep.subr.mxu0 0.0
  %602 = vmatpush1.msra.mxu0 0.0
  %603 = vmatprep.subr.mxu0 0.0
  %604 = vmatpush1.msra.mxu0 0.0
  %605 = vmatprep.subr.mxu0 0.0
  %606 = vmatpush1.msra.mxu0 0.0
  %607 = vmatprep.subr.mxu0 0.0
  %608 = vmatpush1.msra.mxu0 0.0
  %609 = vmatprep.subr.mxu0 0.0
  %610 = vmatpush1.msra.mxu0 0.0
  %611 = vmatprep.subr.mxu0 0.0
  %612 = vmatpush1.msra.mxu0 0.0
  %613 = vmatprep.mubr.f32.mxu0 0.0
  %614 = vmatmul.mubr.f32.gmra.mrb[0].mxu0 %v502
  %v615 = vpop.f32.mrb[0].mxu0
  %v616 = vadd.f32 %v500, %v615
  %v617 = vpop.f32.mrb[0].mxu0
  %618 = vmatprep.mubr.f32.mxu0 0.0
  %619 = vmatmul.mubr.f32.gmra.mrb[0].mxu0 %v505
  %v620 = vpop.f32.mrb[0].mxu0
  %v621 = vadd.f32 %v500, %v620
  %v622 = vpop.f32.mrb[0].mxu0
  %623 = vmatprep.mubr.f32.mxu0 0.0
  %624 = vmatmul.mubr.f32.gmra.mrb[0].mxu0 %v508
  %v625 = vpop.f32.mrb[0].mxu0
  %v626 = vadd.f32 %v500, %v625
  %v627 = vpop.f32.mrb[0].mxu0
  %628 = vmatprep.mubr.f32.mxu0 0.0
  %629 = vmatmul.mubr.f32.gmra.mrb[0].mxu0 %v511
  %v630 = vpop.f32.mrb[0].mxu0
  %v631 = vadd.f32 %v500, %v630
  %v632 = vpop.f32.mrb[0].mxu0
  %633 = vmatprep.mubr.f32.mxu0 0.0
  %634 = vmatmul.mubr.f32.gmra.mrb[0].mxu0 %v514
  %v635 = vpop.f32.mrb[0].mxu0
  %v636 = vadd.f32 %v500, %v635
  %v637 = vpop.f32.mrb[0].mxu0
  %638 = vmatprep.mubr.f32.mxu0 0.0
  %639 = vmatmul.mubr.f32.gmra.mrb[0].mxu0 %v517
  %v640 = vpop.f32.mrb[0].mxu0
  %v641 = vadd.f32 %v500, %v640
  %v642 = vpop.f32.mrb[0].mxu0
  %643 = vmatprep.mubr.f32.mxu0 0.0
  %644 = vmatmul.mubr.f32.gmra.mrb[0].mxu0 %v520
  %v645 = vpop.f32.mrb[0].mxu0
  %v646 = vadd.f32 %v500, %v645
  %v647 = vpop.f32.mrb[0].mxu0
  %648 = vmatprep.mubr.f32.mxu0 0.0
  %649 = vmatmul.mubr.f32.gmra.mrb[0].mxu0 %v523
  %v650 = vpop.f32.mrb[0].mxu0
  %v651 = vadd.f32 %v500, %v650
  %v652 = vpop.f32.mrb[0].mxu0
  %653 = vmatprep.mubr.f32.mxu0 0.0
  %654 = vmatmul.mubr.f32.gmra.mrb[0].mxu0 %v526
  %v655 = vpop.f32.mrb[0].mxu0
  %v656 = vadd.f32 %v500, %v655
  %v657 = vpop.f32.mrb[0].mxu0
  %658 = vmatprep.mubr.f32.mxu0 0.0
  %659 = vmatmul.mubr.f32.gmra.mrb[0].mxu0 %v529
  %v660 = vpop.f32.mrb[0].mxu0
  %v661 = vadd.f32 %v500, %v660
  %v662 = vpop.f32.mrb[0].mxu0
  %663 = vmatprep.mubr.f32.mxu0 0.0
  %664 = vmatmul.mubr.f32.gmra.mrb[0].mxu0 %v532
  %v665 = vpop.f32.mrb[0].mxu0
  %v666 = vadd.f32 %v500, %v665
  %v667 = vpop.f32.mrb[0].mxu0
  %668 = vmatprep.mubr.f32.mxu0 0.0
  %669 = vmatmul.mubr.f32.gmra.mrb[0].mxu0 %v535
  %v670 = vpop.f32.mrb[0].mxu0
  %v671 = vadd.f32 %v500, %v670
  %v672 = vpop.f32.mrb[0].mxu0
  %673 = vmatprep.mubr.f32.mxu0 0.0
  %674 = vmatmul.mubr.f32.gmra.mrb[0].mxu0 %v538
  %v675 = vpop.f32.mrb[0].mxu0
  %v676 = vadd.f32 %v500, %v675
  %v677 = vpop.f32.mrb[0].mxu0
  %678 = vmatprep.mubr.f32.mxu0 0.0
  %679 = vmatmul.mubr.f32.gmra.mrb[0].mxu0 %v541
  %v680 = vpop.f32.mrb[0].mxu0
  %v681 = vadd.f32 %v500, %v680
  %v682 = vpop.f32.mrb[0].mxu0
  %683 = vmatprep.mubr.f32.mxu0 0.0
  %684 = vmatmul.mubr.f32.gmra.mrb[0].mxu0 %v544
  %v685 = vpop.f32.mrb[0].mxu0
  %v686 = vadd.f32 %v500, %v685
  %v687 = vpop.f32.mrb[0].mxu0
  %688 = vmatprep.mubr.f32.mxu0 0.0
  %689 = vmatmul.mubr.f32.gmra.mrb[0].mxu0 %v547
  %v690 = vpop.f32.mrb[0].mxu0
  %v691 = vadd.f32 %v500, %v690
  %v692 = vpop.f32.mrb[0].mxu0
  %693 = vdwg.mxu0
  %v694 = vld [vmem:[%s4 + $0x20] sm:$0xff]
  %v695 = vld [vmem:[%s4 + $0x28] sm:$0xff]
  %v696 = vld [vmem:[%s4 + $0xa2] sm:$0x1]
  %v697 = vlaneseq
  %v698 = vshrl.u32 %v697, 7
  %v699 = vsub.s32 0, %v698
  %v700 = vrot.slane %v696, %v699
  %701 = vmatprep.subr.mxu0 0.0
  %702 = vmatpush1.msra.mxu0 %v694
  %703 = vmatprep.subr.mxu0 0.0
  %704 = vmatpush1.msra.mxu0 %v695
  %705 = vmatprep.subr.mxu0 0.0
  %706 = vmatpush1.msra.mxu0 0.0
  %707 = vmatprep.subr.mxu0 0.0
  %708 = vmatpush1.msra.mxu0 0.0
  %709 = vmatprep.subr.mxu0 0.0
  %710 = vmatpush1.msra.mxu0 0.0
  %711 = vmatprep.subr.mxu0 0.0
  %712 = vmatpush1.msra.mxu0 0.0
  %713 = vmatprep.subr.mxu0 0.0
  %714 = vmatpush1.msra.mxu0 0.0
  %715 = vmatprep.subr.mxu0 0.0
  %716 = vmatpush1.msra.mxu0 0.0
  %717 = vmatprep.subr.mxu0 0.0
  %718 = vmatpush1.msra.mxu0 0.0
  %719 = vmatprep.subr.mxu0 0.0
  %720 = vmatpush1.msra.mxu0 0.0
  %721 = vmatprep.subr.mxu0 0.0
  %722 = vmatpush1.msra.mxu0 0.0
  %723 = vmatprep.subr.mxu0 0.0
  %724 = vmatpush1.msra.mxu0 0.0
  %725 = vmatprep.subr.mxu0 0.0
  %726 = vmatpush1.msra.mxu0 0.0
  %727 = vmatprep.subr.mxu0 0.0
  %728 = vmatpush1.msra.mxu0 0.0
  %729 = vmatprep.subr.mxu0 0.0
  %730 = vmatpush1.msra.mxu0 0.0
  %731 = vmatprep.subr.mxu0 0.0
  %732 = vmatpush1.msra.mxu0 0.0
  %733 = vmatprep.subr.mxu0 0.0
  %734 = vmatpush1.msra.mxu0 0.0
  %735 = vmatprep.subr.mxu0 0.0
  %736 = vmatpush1.msra.mxu0 0.0
  %737 = vmatprep.subr.mxu0 0.0
  %738 = vmatpush1.msra.mxu0 0.0
  %739 = vmatprep.subr.mxu0 0.0
  %740 = vmatpush1.msra.mxu0 0.0
  %741 = vmatprep.subr.mxu0 0.0
  %742 = vmatpush1.msra.mxu0 0.0
  %743 = vmatprep.subr.mxu0 0.0
  %744 = vmatpush1.msra.mxu0 0.0
  %745 = vmatprep.subr.mxu0 0.0
  %746 = vmatpush1.msra.mxu0 0.0
  %747 = vmatprep.subr.mxu0 0.0
  %748 = vmatpush1.msra.mxu0 0.0
  %749 = vmatprep.subr.mxu0 0.0
  %750 = vmatpush1.msra.mxu0 0.0
  %751 = vmatprep.subr.mxu0 0.0
  %752 = vmatpush1.msra.mxu0 0.0
  %753 = vmatprep.subr.mxu0 0.0
  %754 = vmatpush1.msra.mxu0 0.0
  %755 = vmatprep.subr.mxu0 0.0
  %756 = vmatpush1.msra.mxu0 0.0
  %757 = vmatprep.subr.mxu0 0.0
  %758 = vmatpush1.msra.mxu0 0.0
  %759 = vmatprep.subr.mxu0 0.0
  %760 = vmatpush1.msra.mxu0 0.0
  %761 = vmatprep.subr.mxu0 0.0
  %762 = vmatpush1.msra.mxu0 0.0
  %763 = vmatprep.subr.mxu0 0.0
  %764 = vmatpush1.msra.mxu0 0.0
  %765 = vmatprep.mubr.f32.mxu0 0.0
  %766 = vmatmul.mubr.f32.gmra.mrb[0].mxu0 %v502
  %v767 = vpop.f32.mrb[0].mxu0
  %v768 = vadd.f32 %v700, %v767
  %v769 = vpop.f32.mrb[0].mxu0
  %770 = vmatprep.mubr.f32.mxu0 0.0
  %771 = vmatmul.mubr.f32.gmra.mrb[0].mxu0 %v505
  %v772 = vpop.f32.mrb[0].mxu0
  %v773 = vadd.f32 %v700, %v772
  %v774 = vpop.f32.mrb[0].mxu0
  %775 = vmatprep.mubr.f32.mxu0 0.0
  %776 = vmatmul.mubr.f32.gmra.mrb[0].mxu0 %v508
  %v777 = vpop.f32.mrb[0].mxu0
  %v778 = vadd.f32 %v700, %v777
  %v779 = vpop.f32.mrb[0].mxu0
  %780 = vmatprep.mubr.f32.mxu0 0.0
  %781 = vmatmul.mubr.f32.gmra.mrb[0].mxu0 %v511
  %v782 = vpop.f32.mrb[0].mxu0
  %v783 = vadd.f32 %v700, %v782
  %v784 = vpop.f32.mrb[0].mxu0
  %785 = vmatprep.mubr.f32.mxu0 0.0
  %786 = vmatmul.mubr.f32.gmra.mrb[0].mxu0 %v514
  %v787 = vpop.f32.mrb[0].mxu0
  %v788 = vadd.f32 %v700, %v787
  %v789 = vpop.f32.mrb[0].mxu0
  %790 = vmatprep.mubr.f32.mxu0 0.0
  %791 = vmatmul.mubr.f32.gmra.mrb[0].mxu0 %v517
  %v792 = vpop.f32.mrb[0].mxu0
  %v793 = vadd.f32 %v700, %v792
  %v794 = vpop.f32.mrb[0].mxu0
  %795 = vmatprep.mubr.f32.mxu0 0.0
  %796 = vmatmul.mubr.f32.gmra.mrb[0].mxu0 %v520
  %v797 = vpop.f32.mrb[0].mxu0
  %v798 = vadd.f32 %v700, %v797
  %v799 = vpop.f32.mrb[0].mxu0
  %800 = vmatprep.mubr.f32.mxu0 0.0
  %801 = vmatmul.mubr.f32.gmra.mrb[0].mxu0 %v523
  %v802 = vpop.f32.mrb[0].mxu0
  %v803 = vadd.f32 %v700, %v802
  %v804 = vpop.f32.mrb[0].mxu0
  %805 = vmatprep.mubr.f32.mxu0 0.0
  %806 = vmatmul.mubr.f32.gmra.mrb[0].mxu0 %v526
  %v807 = vpop.f32.mrb[0].mxu0
  %v808 = vadd.f32 %v700, %v807
  %v809 = vpop.f32.mrb[0].mxu0
  %810 = vmatprep.mubr.f32.mxu0 0.0
  %811 = vmatmul.mubr.f32.gmra.mrb[0].mxu0 %v529
  %v812 = vpop.f32.mrb[0].mxu0
  %v813 = vadd.f32 %v700, %v812
  %v814 = vpop.f32.mrb[0].mxu0
  %815 = vmatprep.mubr.f32.mxu0 0.0
  %816 = vmatmul.mubr.f32.gmra.mrb[0].mxu0 %v532
  %v817 = vpop.f32.mrb[0].mxu0
  %v818 = vadd.f32 %v700, %v817
  %v819 = vpop.f32.mrb[0].mxu0
  %820 = vmatprep.mubr.f32.mxu0 0.0
  %821 = vmatmul.mubr.f32.gmra.mrb[0].mxu0 %v535
  %v822 = vpop.f32.mrb[0].mxu0
  %v823 = vadd.f32 %v700, %v822
  %v824 = vpop.f32.mrb[0].mxu0
  %825 = vmatprep.mubr.f32.mxu0 0.0
  %826 = vmatmul.mubr.f32.gmra.mrb[0].mxu0 %v538
  %v827 = vpop.f32.mrb[0].mxu0
  %v828 = vadd.f32 %v700, %v827
  %v829 = vpop.f32.mrb[0].mxu0
  %830 = vmatprep.mubr.f32.mxu0 0.0
  %831 = vmatmul.mubr.f32.gmra.mrb[0].mxu0 %v541
  %v832 = vpop.f32.mrb[0].mxu0
  %v833 = vadd.f32 %v700, %v832
  %v834 = vpop.f32.mrb[0].mxu0
  %835 = vmatprep.mubr.f32.mxu0 0.0
  %836 = vmatmul.mubr.f32.gmra.mrb[0].mxu0 %v544
  %v837 = vpop.f32.mrb[0].mxu0
  %v838 = vadd.f32 %v700, %v837
  %v839 = vpop.f32.mrb[0].mxu0
  %840 = vmatprep.mubr.f32.mxu0 0.0
  %841 = vmatmul.mubr.f32.gmra.mrb[0].mxu0 %v547
  %v842 = vpop.f32.mrb[0].mxu0
  %v843 = vadd.f32 %v700, %v842
  %v844 = vpop.f32.mrb[0].mxu0
  %845 = vdwg.mxu0
  %v846 = vld [vmem:[%s3] sm:$0xff]
  %v847 = vld [vmem:[%s3 + $0x8] sm:$0xff]
  %v848 = vld [vmem:[%s3 + $0x10] sm:$0xff]
  %v849 = vld [vmem:[%s3 + $0x18] sm:$0xff]
  %v850 = vld [vmem:[%s3 + $0x20] sm:$0xff]
  %v851 = vld [vmem:[%s3 + $0x28] sm:$0xff]
  %v852 = vld [vmem:[%s3 + $0x30] sm:$0xff]
  %v853 = vld [vmem:[%s3 + $0x38] sm:$0xff]
  %v854 = vld [vmem:[%s3 + $0x40] sm:$0xff]
  %v855 = vld [vmem:[%s3 + $0x48] sm:$0xff]
  %v856 = vld [vmem:[%s3 + $0x50] sm:$0xff]
  %v857 = vld [vmem:[%s3 + $0x58] sm:$0xff]
  %v858 = vld [vmem:[%s3 + $0x60] sm:$0xff]
  %v859 = vld [vmem:[%s3 + $0x68] sm:$0xff]
  %v860 = vld [vmem:[%s3 + $0x70] sm:$0xff]
  %v861 = vld [vmem:[%s3 + $0x78] sm:$0xff]
  %862 = vmatprep.subr.mxu0 0.0
  %863 = vmatpush1.msra.mxu0 %v616
  %864 = vmatprep.subr.mxu0 0.0
  %865 = vmatpush1.msra.mxu0 %v621
  %866 = vmatprep.subr.mxu0 0.0
  %867 = vmatpush1.msra.mxu0 %v626
  %868 = vmatprep.subr.mxu0 0.0
  %869 = vmatpush1.msra.mxu0 %v631
  %870 = vmatprep.subr.mxu0 0.0
  %871 = vmatpush1.msra.mxu0 %v636
  %872 = vmatprep.subr.mxu0 0.0
  %873 = vmatpush1.msra.mxu0 %v641
  %874 = vmatprep.subr.mxu0 0.0
  %875 = vmatpush1.msra.mxu0 %v646
  %876 = vmatprep.subr.mxu0 0.0
  %877 = vmatpush1.msra.mxu0 %v651
  %878 = vmatprep.subr.mxu0 0.0
  %879 = vmatpush1.msra.mxu0 %v656
  %880 = vmatprep.subr.mxu0 0.0
  %881 = vmatpush1.msra.mxu0 %v661
  %882 = vmatprep.subr.mxu0 0.0
  %883 = vmatpush1.msra.mxu0 %v666
  %884 = vmatprep.subr.mxu0 0.0
  %885 = vmatpush1.msra.mxu0 %v671
  %886 = vmatprep.subr.mxu0 0.0
  %887 = vmatpush1.msra.mxu0 %v676
  %888 = vmatprep.subr.mxu0 0.0
  %889 = vmatpush1.msra.mxu0 %v681
  %890 = vmatprep.subr.mxu0 0.0
  %891 = vmatpush1.msra.mxu0 %v686
  %892 = vmatprep.subr.mxu0 0.0
  %893 = vmatpush1.msra.mxu0 %v691
  %894 = vmatprep.subr.mxu0 0.0
  %895 = vmatpush1.msra.mxu0 %v768
  %896 = vmatprep.subr.mxu0 0.0
  %897 = vmatpush1.msra.mxu0 %v773
  %898 = vmatprep.subr.mxu0 0.0
  %899 = vmatpush1.msra.mxu0 %v778
  %900 = vmatprep.subr.mxu0 0.0
  %901 = vmatpush1.msra.mxu0 %v783
  %902 = vmatprep.subr.mxu0 0.0
  %903 = vmatpush1.msra.mxu0 %v788
  %904 = vmatprep.subr.mxu0 0.0
  %905 = vmatpush1.msra.mxu0 %v793
  %906 = vmatprep.subr.mxu0 0.0
  %907 = vmatpush1.msra.mxu0 %v798
  %908 = vmatprep.subr.mxu0 0.0
  %909 = vmatpush1.msra.mxu0 %v803
  %910 = vmatprep.subr.mxu0 0.0
  %911 = vmatpush1.msra.mxu0 %v808
  %912 = vmatprep.subr.mxu0 0.0
  %913 = vmatpush1.msra.mxu0 %v813
  %914 = vmatprep.subr.mxu0 0.0
  %915 = vmatpush1.msra.mxu0 %v818
  %916 = vmatprep.subr.mxu0 0.0
  %917 = vmatpush1.msra.mxu0 %v823
  %918 = vmatprep.subr.mxu0 0.0
  %919 = vmatpush1.msra.mxu0 %v828
  %920 = vmatprep.subr.mxu0 0.0
  %921 = vmatpush1.msra.mxu0 %v833
  %922 = vmatprep.subr.mxu0 0.0
  %923 = vmatpush1.msra.mxu0 %v838
  %924 = vmatprep.subr.mxu0 0.0
  %925 = vmatpush1.msra.mxu0 %v843
  %926 = vmatprep.mubr.f32.mxu0 %v847
  %927 = vmatmul.mubr.f32.gmra.mrb[0].mxu0 %v846
  %v928 = vpop.f32.mrb[0].mxu0
  %v929 = vadd.f32 0.0, %v928
  %v930 = vpop.f32.mrb[0].mxu0
  %931 = vmatprep.mubr.f32.mxu0 %v849
  %932 = vmatmul.mubr.f32.gmra.mrb[0].mxu0 %v848
  %v933 = vpop.f32.mrb[0].mxu0
  %v934 = vadd.f32 0.0, %v933
  %v935 = vpop.f32.mrb[0].mxu0
  %936 = vmatprep.mubr.f32.mxu0 %v851
  %937 = vmatmul.mubr.f32.gmra.mrb[0].mxu0 %v850
  %v938 = vpop.f32.mrb[0].mxu0
  %v939 = vadd.f32 0.0, %v938
  %v940 = vpop.f32.mrb[0].mxu0
  %941 = vmatprep.mubr.f32.mxu0 %v853
  %942 = vmatmul.mubr.f32.gmra.mrb[0].mxu0 %v852
  %v943 = vpop.f32.mrb[0].mxu0
  %v944 = vadd.f32 0.0, %v943
  %v945 = vpop.f32.mrb[0].mxu0
  %946 = vmatprep.mubr.f32.mxu0 %v855
  %947 = vmatmul.mubr.f32.gmra.mrb[0].mxu0 %v854
  %v948 = vpop.f32.mrb[0].mxu0
  %v949 = vadd.f32 0.0, %v948
  %v950 = vpop.f32.mrb[0].mxu0
  %951 = vmatprep.mubr.f32.mxu0 %v857
  %952 = vmatmul.mubr.f32.gmra.mrb[0].mxu0 %v856
  %v953 = vpop.f32.mrb[0].mxu0
  %v954 = vadd.f32 0.0, %v953
  %v955 = vpop.f32.mrb[0].mxu0
  %956 = vmatprep.mubr.f32.mxu0 %v859
  %957 = vmatmul.mubr.f32.gmra.mrb[0].mxu0 %v858
  %v958 = vpop.f32.mrb[0].mxu0
  %v959 = vadd.f32 0.0, %v958
  %v960 = vpop.f32.mrb[0].mxu0
  %961 = vmatprep.mubr.f32.mxu0 %v861
  %962 = vmatmul.mubr.f32.gmra.mrb[0].mxu0 %v860
  %v963 = vpop.f32.mrb[0].mxu0
  %v964 = vadd.f32 0.0, %v963
  %v965 = vpop.f32.mrb[0].mxu0
  %966 = vdwg.mxu0
  %v967 = vmax.f32 %v929, %v949
  %v968 = vmax.f32 %v934, %v954
  %v969 = vmax.f32 %v939, %v959
  %v970 = vmax.f32 %v944, %v964
  %v971 = vld [vmem:[%s4 + $0xa3] sm:$0x1]
  %v972 = vlaneseq
  %v973 = vshrl.u32 %v972, 7
  %v974 = vsub.s32 0, %v973
  %v975 = vrot.slane %v971, %v974
  %v976 = vadd.f32 %v967, %v975
  %v977 = vadd.f32 %v968, %v975
  %v978 = vadd.f32 %v969, %v975
  %v979 = vadd.f32 %v970, %v975
  %v980 = vmax.f32 %v976, 0.0
  %v981 = vmax.f32 %v977, 0.0
  %v982 = vmax.f32 %v978, 0.0
  %v983 = vmax.f32 %v979, 0.0
  %v984 = vld [vmem:[%s4 + $0x90] sm:$0xff]
  %v985 = vld [vmem:[%s4 + $0x98] sm:$0xff]
  %vm986 = vcmp.gt.f32.partialorder %v984, 0.5
  %vm987 = vcmp.gt.f32.partialorder %v985, 0.5
  %v988 = vld [vmem:[%s4 + $0x30] sm:$0xff]
  %v989 = vld [vmem:[%s4 + $0x38] sm:$0xff]
  %v990 = vld [vmem:[%s4 + $0xa4] sm:$0x1]
  %v991 = vlaneseq
  %v992 = vshrl.u32 %v991, 7
  %v993 = vsub.s32 0, %v992
  %v994 = vrot.slane %v990, %v993
  %v996 = vsel %vm38, %v980, 0
  %v999 = vsel %vm38, %v981, 0
  %v1002 = vsel %vm38, %v982, 0
  %v1005 = vsel %vm38, %v983, 0
  %1007 = vmatprep.subr.mxu0 0.0
  %1008 = vmatpush1.msra.mxu0 %v988
  %1009 = vmatprep.subr.mxu0 0.0
  %1010 = vmatpush1.msra.mxu0 %v989
  %1011 = vmatprep.subr.mxu0 0.0
  %1012 = vmatpush1.msra.mxu0 0.0
  %1013 = vmatprep.subr.mxu0 0.0
  %1014 = vmatpush1.msra.mxu0 0.0
  %1015 = vmatprep.subr.mxu0 0.0
  %1016 = vmatpush1.msra.mxu0 0.0
  %1017 = vmatprep.subr.mxu0 0.0
  %1018 = vmatpush1.msra.mxu0 0.0
  %1019 = vmatprep.subr.mxu0 0.0
  %1020 = vmatpush1.msra.mxu0 0.0
  %1021 = vmatprep.subr.mxu0 0.0
  %1022 = vmatpush1.msra.mxu0 0.0
  %1023 = vmatprep.subr.mxu0 0.0
  %1024 = vmatpush1.msra.mxu0 0.0
  %1025 = vmatprep.subr.mxu0 0.0
  %1026 = vmatpush1.msra.mxu0 0.0
  %1027 = vmatprep.subr.mxu0 0.0
  %1028 = vmatpush1.msra.mxu0 0.0
  %1029 = vmatprep.subr.mxu0 0.0
  %1030 = vmatpush1.msra.mxu0 0.0
  %1031 = vmatprep.subr.mxu0 0.0
  %1032 = vmatpush1.msra.mxu0 0.0
  %1033 = vmatprep.subr.mxu0 0.0
  %1034 = vmatpush1.msra.mxu0 0.0
  %1035 = vmatprep.subr.mxu0 0.0
  %1036 = vmatpush1.msra.mxu0 0.0
  %1037 = vmatprep.subr.mxu0 0.0
  %1038 = vmatpush1.msra.mxu0 0.0
  %1039 = vmatprep.subr.mxu0 0.0
  %1040 = vmatpush1.msra.mxu0 0.0
  %1041 = vmatprep.subr.mxu0 0.0
  %1042 = vmatpush1.msra.mxu0 0.0
  %1043 = vmatprep.subr.mxu0 0.0
  %1044 = vmatpush1.msra.mxu0 0.0
  %1045 = vmatprep.subr.mxu0 0.0
  %1046 = vmatpush1.msra.mxu0 0.0
  %1047 = vmatprep.subr.mxu0 0.0
  %1048 = vmatpush1.msra.mxu0 0.0
  %1049 = vmatprep.subr.mxu0 0.0
  %1050 = vmatpush1.msra.mxu0 0.0
  %1051 = vmatprep.subr.mxu0 0.0
  %1052 = vmatpush1.msra.mxu0 0.0
  %1053 = vmatprep.subr.mxu0 0.0
  %1054 = vmatpush1.msra.mxu0 0.0
  %1055 = vmatprep.subr.mxu0 0.0
  %1056 = vmatpush1.msra.mxu0 0.0
  %1057 = vmatprep.subr.mxu0 0.0
  %1058 = vmatpush1.msra.mxu0 0.0
  %1059 = vmatprep.subr.mxu0 0.0
  %1060 = vmatpush1.msra.mxu0 0.0
  %1061 = vmatprep.subr.mxu0 0.0
  %1062 = vmatpush1.msra.mxu0 0.0
  %1063 = vmatprep.subr.mxu0 0.0
  %1064 = vmatpush1.msra.mxu0 0.0
  %1065 = vmatprep.subr.mxu0 0.0
  %1066 = vmatpush1.msra.mxu0 0.0
  %1067 = vmatprep.subr.mxu0 0.0
  %1068 = vmatpush1.msra.mxu0 0.0
  %1069 = vmatprep.subr.mxu0 0.0
  %1070 = vmatpush1.msra.mxu0 0.0
  %1071 = vmatprep.mubr.f32.mxu0 0.0
  %1072 = vmatmul.mubr.f32.gmra.mrb[0].mxu0 %v996
  %v1073 = vpop.f32.mrb[0].mxu0
  %v1074 = vadd.f32 %v994, %v1073
  %v1075 = vpop.f32.mrb[0].mxu0
  %1076 = vmatprep.mubr.f32.mxu0 0.0
  %1077 = vmatmul.mubr.f32.gmra.mrb[0].mxu0 %v999
  %v1078 = vpop.f32.mrb[0].mxu0
  %v1079 = vadd.f32 %v994, %v1078
  %v1080 = vpop.f32.mrb[0].mxu0
  %1081 = vmatprep.mubr.f32.mxu0 0.0
  %1082 = vmatmul.mubr.f32.gmra.mrb[0].mxu0 %v1002
  %v1083 = vpop.f32.mrb[0].mxu0
  %v1084 = vadd.f32 %v994, %v1083
  %v1085 = vpop.f32.mrb[0].mxu0
  %1086 = vmatprep.mubr.f32.mxu0 0.0
  %1087 = vmatmul.mubr.f32.gmra.mrb[0].mxu0 %v1005
  %v1088 = vpop.f32.mrb[0].mxu0
  %v1089 = vadd.f32 %v994, %v1088
  %v1090 = vpop.f32.mrb[0].mxu0
  %1091 = vdwg.mxu0
  %v1092 = vld [vmem:[%s4 + $0x50] sm:$0xff]
  %1094 = vrot.lane.b32.xlu0 %v1089, 96
  %v1095 = vpop.permute.xlu0 %1094
  %1098 = vrot.lane.b32.xlu0 %v1084, 96
  %v1099 = vpop.permute.xlu0 %1098
  %1102 = vrot.lane.b32.xlu0 %v1079, 96
  %v1103 = vpop.permute.xlu0 %1102
  %1106 = vrot.lane.b32.xlu0 %v1074, 96
  %v1107 = vpop.permute.xlu0 %1106
  %v1109 = vxor.u32 %v1074, 2147483648
  %v1110 = vxor.u32 %v1095, 2147483648
  %v1111 = vmul.f32 %v1109, 1.442695
  %v1112 = vpow.pop %v1111
  %v1113 = vmul.f32 %v1110, 1.442695
  %v1114 = vpow.pop %v1113
  %v1115 = vadd.f32 %v1112, 1.0
  %v1116 = vadd.f32 %v1114, 1.0
  %v1117 = vrcp.pop %v1115
  %v1118 = vmul.f32 1.0, %v1117
  %v1119 = vrcp.pop %v1116
  %v1120 = vmul.f32 1.0, %v1119
  %v1121 = vtanh.pop %v1074
  %v1122 = vtanh.pop %v1095
  %1125 = vrot.lane.b32.xlu0 %v1121, 104
  %v1126 = vpop.permute.xlu0 %1125
  %1127 = vrot.lane.b32.xlu0 %v1122, 104
  %v1128 = vpop.permute.xlu0 %1127
  %v1131 = vmul.f32 %v1118, %v1126
  %v1132 = vmul.f32 %v1120, %v1128
  %v1133 = vtanh.pop %v1131
  %v1134 = vtanh.pop %v1132
  %1137 = vrot.lane.b32.xlu0 %v1133, 16
  %v1138 = vpop.permute.xlu0 %1137
  %1139 = vrot.lane.b32.xlu0 %v1134, 16
  %v1140 = vpop.permute.xlu0 %1139
  %v1143 = vmul.f32 %v1118, %v1138
  %v1144 = vmul.f32 %v1120, %v1140
  %1146 = vrot.lane.b32.xlu0 %v1143, 112
  %v1147 = vpop.permute.xlu0 %1146
  %vm1149 = vcmask 64512
  %1150 = vst.msk [vmem:[#allocation2] sm:$0xff] %vm1149, %v1147
  %1152 = vrot.lane.b32.xlu0 %v1144, 120
  %v1153 = vpop.permute.xlu0 %1152
  %vm1155 = vcmask 130112
  %1156 = vst.msk [vmem:[#allocation2 + $0x18] sm:$0xff] %vm1155, %v1153
  %1157 = vrot.lane.b32.xlu0 %v1144, 112
  %v1158 = vpop.permute.xlu0 %1157
  %v1159 = vsel %vm1149, %v1147, 0
  %v1161 = vsel %vm1149, %v1158, 0
  %1163 = vmatprep.subr.mxu0 0.0
  %1164 = vmatpush1.msra.mxu0 %v1092
  %1165 = vmatprep.subr.mxu0 0.0
  %1166 = vmatpush1.msra.mxu0 0.0
  %1167 = vmatprep.subr.mxu0 0.0
  %1168 = vmatpush1.msra.mxu0 0.0
  %1169 = vmatprep.subr.mxu0 0.0
  %1170 = vmatpush1.msra.mxu0 0.0
  %1171 = vmatprep.subr.mxu0 0.0
  %1172 = vmatpush1.msra.mxu0 0.0
  %1173 = vmatprep.subr.mxu0 0.0
  %1174 = vmatpush1.msra.mxu0 0.0
  %1175 = vmatprep.subr.mxu0 0.0
  %1176 = vmatpush1.msra.mxu0 0.0
  %1177 = vmatprep.subr.mxu0 0.0
  %1178 = vmatpush1.msra.mxu0 0.0
  %1179 = vmatprep.subr.mxu0 0.0
  %1180 = vmatpush1.msra.mxu0 0.0
  %1181 = vmatprep.subr.mxu0 0.0
  %1182 = vmatpush1.msra.mxu0 0.0
  %1183 = vmatprep.subr.mxu0 0.0
  %1184 = vmatpush1.msra.mxu0 0.0
  %1185 = vmatprep.subr.mxu0 0.0
  %1186 = vmatpush1.msra.mxu0 0.0
  %1187 = vmatprep.subr.mxu0 0.0
  %1188 = vmatpush1.msra.mxu0 0.0
  %1189 = vmatprep.subr.mxu0 0.0
  %1190 = vmatpush1.msra.mxu0 0.0
  %1191 = vmatprep.subr.mxu0 0.0
  %1192 = vmatpush1.msra.mxu0 0.0
  %1193 = vmatprep.subr.mxu0 0.0
  %1194 = vmatpush1.msra.mxu0 0.0
  %1195 = vmatprep.subr.mxu0 0.0
  %1196 = vmatpush1.msra.mxu0 0.0
  %1197 = vmatprep.subr.mxu0 0.0
  %1198 = vmatpush1.msra.mxu0 0.0
  %1199 = vmatprep.subr.mxu0 0.0
  %1200 = vmatpush1.msra.mxu0 0.0
  %1201 = vmatprep.subr.mxu0 0.0
  %1202 = vmatpush1.msra.mxu0 0.0
  %1203 = vmatprep.subr.mxu0 0.0
  %1204 = vmatpush1.msra.mxu0 0.0
  %1205 = vmatprep.subr.mxu0 0.0
  %1206 = vmatpush1.msra.mxu0 0.0
  %1207 = vmatprep.subr.mxu0 0.0
  %1208 = vmatpush1.msra.mxu0 0.0
  %1209 = vmatprep.subr.mxu0 0.0
  %1210 = vmatpush1.msra.mxu0 0.0
  %1211 = vmatprep.subr.mxu0 0.0
  %1212 = vmatpush1.msra.mxu0 0.0
  %1213 = vmatprep.subr.mxu0 0.0
  %1214 = vmatpush1.msra.mxu0 0.0
  %1215 = vmatprep.subr.mxu0 0.0
  %1216 = vmatpush1.msra.mxu0 0.0
  %1217 = vmatprep.subr.mxu0 0.0
  %1218 = vmatpush1.msra.mxu0 0.0
  %1219 = vmatprep.subr.mxu0 0.0
  %1220 = vmatpush1.msra.mxu0 0.0
  %1221 = vmatprep.subr.mxu0 0.0
  %1222 = vmatpush1.msra.mxu0 0.0
  %1223 = vmatprep.subr.mxu0 0.0
  %1224 = vmatpush1.msra.mxu0 0.0
  %1225 = vmatprep.subr.mxu0 0.0
  %1226 = vmatpush1.msra.mxu0 0.0
  %1227 = vmatprep.mubr.f32.mxu0 0.0
  %1228 = vmatmul.mubr.f32.gmra.mrb[0].mxu0 %v1159
  %v1229 = vpop.f32.mrb[0].mxu0
  %v1230 = vadd.f32 0.0, %v1229
  %v1231 = vpop.f32.mrb[0].mxu0
  %1232 = vmatprep.mubr.f32.mxu0 0.0
  %1233 = vmatmul.mubr.f32.gmra.mrb[0].mxu0 %v1161
  %v1234 = vpop.f32.mrb[0].mxu0
  %v1235 = vadd.f32 0.0, %v1234
  %v1236 = vpop.f32.mrb[0].mxu0
  %1237 = vdwg.mxu0
  %1240 = vrot.lane.b32.xlu0 %v1230, 96
  %v1241 = vpop.permute.xlu0 %1240
  %1242 = vrot.lane.b32.xlu0 %v1235, 96
  %v1243 = vpop.permute.xlu0 %1242
  %v1246 = vsel %vm986, %v1230, %v1241
  %v1247 = vsel %vm987, %v1235, %v1243
  %v1248 = vadd.f32 %v1079, %v1246
  %v1249 = vadd.f32 %v1099, %v1247
  %v1250 = vxor.u32 %v1248, 2147483648
  %v1251 = vxor.u32 %v1249, 2147483648
  %v1252 = vmul.f32 %v1250, 1.442695
  %v1253 = vpow.pop %v1252
  %v1254 = vmul.f32 %v1251, 1.442695
  %v1255 = vpow.pop %v1254
  %v1256 = vadd.f32 %v1253, 1.0
  %v1257 = vadd.f32 %v1255, 1.0
  %v1258 = vrcp.pop %v1256
  %v1259 = vmul.f32 1.0, %v1258
  %v1260 = vrcp.pop %v1257
  %v1261 = vmul.f32 1.0, %v1260
  %v1262 = vtanh.pop %v1248
  %v1263 = vtanh.pop %v1249
  %1266 = vrot.lane.b32.xlu0 %v1131, 8
  %v1267 = vpop.permute.xlu0 %1266
  %1268 = vrot.lane.b32.xlu0 %v1132, 8
  %v1269 = vpop.permute.xlu0 %1268
  %v1272 = vmul.f32 %v1259, %v1267
  %v1273 = vmul.f32 %v1261, %v1269
  %1276 = vrot.lane.b32.xlu0 %v1262, 104
  %v1277 = vpop.permute.xlu0 %1276
  %1278 = vrot.lane.b32.xlu0 %v1263, 104
  %v1279 = vpop.permute.xlu0 %1278
  %v1282 = vmul.f32 %v1259, %v1277
  %v1283 = vmul.f32 %v1261, %v1279
  %1286 = vrot.lane.b32.xlu0 %v1282, 8
  %v1287 = vpop.permute.xlu0 %1286
  %1288 = vrot.lane.b32.xlu0 %v1283, 8
  %v1289 = vpop.permute.xlu0 %1288
  %v1292 = vadd.f32 %v1272, %v1287
  %v1293 = vadd.f32 %v1273, %v1289
  %v1294 = vtanh.pop %v1292
  %v1295 = vtanh.pop %v1293
  %1298 = vrot.lane.b32.xlu0 %v1294, 8
  %v1299 = vpop.permute.xlu0 %1298
  %1300 = vrot.lane.b32.xlu0 %v1295, 8
  %v1301 = vpop.permute.xlu0 %1300
  %v1304 = vmul.f32 %v1259, %v1299
  %v1305 = vmul.f32 %v1261, %v1301
  %1307 = vrot.lane.b32.xlu0 %v1304, 112
  %v1308 = vpop.permute.xlu0 %1307
  %1310 = vst.msk [vmem:[#allocation2 + $0x8] sm:$0xff] %vm1149, %v1308
  %1312 = vrot.lane.b32.xlu0 %v1305, 120
  %v1313 = vpop.permute.xlu0 %1312
  %1315 = vst.msk [vmem:[#allocation2 + $0x10] sm:$0xff] %vm1155, %v1313
  %1316 = vrot.lane.b32.xlu0 %v1305, 112
  %v1317 = vpop.permute.xlu0 %1316
  %v1318 = vsel %vm1149, %v1308, 0
  %v1320 = vsel %vm1149, %v1317, 0
  %1322 = vmatprep.subr.mxu0 0.0
  %1323 = vmatpush1.msra.mxu0 %v1092
  %1324 = vmatprep.subr.mxu0 0.0
  %1325 = vmatpush1.msra.mxu0 0.0
  %1326 = vmatprep.subr.mxu0 0.0
  %1327 = vmatpush1.msra.mxu0 0.0
  %1328 = vmatprep.subr.mxu0 0.0
  %1329 = vmatpush1.msra.mxu0 0.0
  %1330 = vmatprep.subr.mxu0 0.0
  %1331 = vmatpush1.msra.mxu0 0.0
  %1332 = vmatprep.subr.mxu0 0.0
  %1333 = vmatpush1.msra.mxu0 0.0
  %1334 = vmatprep.subr.mxu0 0.0
  %1335 = vmatpush1.msra.mxu0 0.0
  %1336 = vmatprep.subr.mxu0 0.0
  %1337 = vmatpush1.msra.mxu0 0.0
  %1338 = vmatprep.subr.mxu0 0.0
  %1339 = vmatpush1.msra.mxu0 0.0
  %1340 = vmatprep.subr.mxu0 0.0
  %1341 = vmatpush1.msra.mxu0 0.0
  %1342 = vmatprep.subr.mxu0 0.0
  %1343 = vmatpush1.msra.mxu0 0.0
  %1344 = vmatprep.subr.mxu0 0.0
  %1345 = vmatpush1.msra.mxu0 0.0
  %1346 = vmatprep.subr.mxu0 0.0
  %1347 = vmatpush1.msra.mxu0 0.0
  %1348 = vmatprep.subr.mxu0 0.0
  %1349 = vmatpush1.msra.mxu0 0.0
  %1350 = vmatprep.subr.mxu0 0.0
  %1351 = vmatpush1.msra.mxu0 0.0
  %1352 = vmatprep.subr.mxu0 0.0
  %1353 = vmatpush1.msra.mxu0 0.0
  %1354 = vmatprep.subr.mxu0 0.0
  %1355 = vmatpush1.msra.mxu0 0.0
  %1356 = vmatprep.subr.mxu0 0.0
  %1357 = vmatpush1.msra.mxu0 0.0
  %1358 = vmatprep.subr.mxu0 0.0
  %1359 = vmatpush1.msra.mxu0 0.0
  %1360 = vmatprep.subr.mxu0 0.0
  %1361 = vmatpush1.msra.mxu0 0.0
  %1362 = vmatprep.subr.mxu0 0.0
  %1363 = vmatpush1.msra.mxu0 0.0
  %1364 = vmatprep.subr.mxu0 0.0
  %1365 = vmatpush1.msra.mxu0 0.0
  %1366 = vmatprep.subr.mxu0 0.0
  %1367 = vmatpush1.msra.mxu0 0.0
  %1368 = vmatprep.subr.mxu0 0.0
  %1369 = vmatpush1.msra.mxu0 0.0
  %1370 = vmatprep.subr.mxu0 0.0
  %1371 = vmatpush1.msra.mxu0 0.0
  %1372 = vmatprep.subr.mxu0 0.0
  %1373 = vmatpush1.msra.mxu0 0.0
  %1374 = vmatprep.subr.mxu0 0.0
  %1375 = vmatpush1.msra.mxu0 0.0
  %1376 = vmatprep.subr.mxu0 0.0
  %1377 = vmatpush1.msra.mxu0 0.0
  %1378 = vmatprep.subr.mxu0 0.0
  %1379 = vmatpush1.msra.mxu0 0.0
  %1380 = vmatprep.subr.mxu0 0.0
  %1381 = vmatpush1.msra.mxu0 0.0
  %1382 = vmatprep.subr.mxu0 0.0
  %1383 = vmatpush1.msra.mxu0 0.0
  %1384 = vmatprep.subr.mxu0 0.0
  %1385 = vmatpush1.msra.mxu0 0.0
  %1386 = vmatprep.mubr.f32.mxu0 0.0
  %1387 = vmatmul.mubr.f32.gmra.mrb[0].mxu0 %v1318
  %v1388 = vpop.f32.mrb[0].mxu0
  %v1389 = vadd.f32 0.0, %v1388
  %v1390 = vpop.f32.mrb[0].mxu0
  %1391 = vmatprep.mubr.f32.mxu0 0.0
  %1392 = vmatmul.mubr.f32.gmra.mrb[0].mxu0 %v1320
  %v1393 = vpop.f32.mrb[0].mxu0
  %v1394 = vadd.f32 0.0, %v1393
  %v1395 = vpop.f32.mrb[0].mxu0
  %1396 = vdwg.mxu0
  %1399 = vrot.lane.b32.xlu0 %v1389, 96
  %v1400 = vpop.permute.xlu0 %1399
  %1401 = vrot.lane.b32.xlu0 %v1394, 96
  %v1402 = vpop.permute.xlu0 %1401
  %v1405 = vsel %vm986, %v1389, %v1400
  %v1406 = vsel %vm987, %v1394, %v1402
  %v1407 = vadd.f32 %v1084, %v1405
  %v1408 = vadd.f32 %v1103, %v1406
  %v1409 = vxor.u32 %v1407, 2147483648
  %v1410 = vxor.u32 %v1408, 2147483648
  %v1411 = vmul.f32 %v1409, 1.442695
  %v1412 = vpow.pop %v1411
  %v1413 = vmul.f32 %v1410, 1.442695
  %v1414 = vpow.pop %v1413
  %v1415 = vadd.f32 %v1412, 1.0
  %v1416 = vadd.f32 %v1414, 1.0
  %v1417 = vrcp.pop %v1415
  %v1418 = vmul.f32 1.0, %v1417
  %v1419 = vrcp.pop %v1416
  %v1420 = vmul.f32 1.0, %v1419
  %v1421 = vtanh.pop %v1407
  %v1422 = vtanh.pop %v1408
  %v1423 = vmul.f32 %v1418, %v1292
  %v1424 = vmul.f32 %v1420, %v1293
  %1427 = vrot.lane.b32.xlu0 %v1421, 104
  %v1428 = vpop.permute.xlu0 %1427
  %1429 = vrot.lane.b32.xlu0 %v1422, 104
  %v1430 = vpop.permute.xlu0 %1429
  %v1433 = vmul.f32 %v1418, %v1428
  %v1434 = vmul.f32 %v1420, %v1430
  %1437 = vrot.lane.b32.xlu0 %v1433, 8
  %v1438 = vpop.permute.xlu0 %1437
  %1439 = vrot.lane.b32.xlu0 %v1434, 8
  %v1440 = vpop.permute.xlu0 %1439
  %v1443 = vadd.f32 %v1423, %v1438
  %v1444 = vadd.f32 %v1424, %v1440
  %v1445 = vtanh.pop %v1443
  %v1446 = vtanh.pop %v1444
  %1449 = vrot.lane.b32.xlu0 %v1445, 8
  %v1450 = vpop.permute.xlu0 %1449
  %1451 = vrot.lane.b32.xlu0 %v1446, 8
  %v1452 = vpop.permute.xlu0 %1451
  %v1455 = vmul.f32 %v1418, %v1450
  %v1456 = vmul.f32 %v1420, %v1452
  %1458 = vrot.lane.b32.xlu0 %v1455, 112
  %v1459 = vpop.permute.xlu0 %1458
  %1461 = vst.msk [vmem:[#allocation2 + $0x10] sm:$0xff] %vm1149, %v1459
  %1463 = vrot.lane.b32.xlu0 %v1456, 120
  %v1464 = vpop.permute.xlu0 %1463
  %1466 = vst.msk [vmem:[#allocation2 + $0x8] sm:$0xff] %vm1155, %v1464
  %1467 = vrot.lane.b32.xlu0 %v1456, 112
  %v1468 = vpop.permute.xlu0 %1467
  %v1469 = vsel %vm1149, %v1459, 0
  %v1471 = vsel %vm1149, %v1468, 0
  %1473 = vmatprep.subr.mxu0 0.0
  %1474 = vmatpush1.msra.mxu0 %v1092
  %1475 = vmatprep.subr.mxu0 0.0
  %1476 = vmatpush1.msra.mxu0 0.0
  %1477 = vmatprep.subr.mxu0 0.0
  %1478 = vmatpush1.msra.mxu0 0.0
  %1479 = vmatprep.subr.mxu0 0.0
  %1480 = vmatpush1.msra.mxu0 0.0
  %1481 = vmatprep.subr.mxu0 0.0
  %1482 = vmatpush1.msra.mxu0 0.0
  %1483 = vmatprep.subr.mxu0 0.0
  %1484 = vmatpush1.msra.mxu0 0.0
  %1485 = vmatprep.subr.mxu0 0.0
  %1486 = vmatpush1.msra.mxu0 0.0
  %1487 = vmatprep.subr.mxu0 0.0
  %1488 = vmatpush1.msra.mxu0 0.0
  %1489 = vmatprep.subr.mxu0 0.0
  %1490 = vmatpush1.msra.mxu0 0.0
  %1491 = vmatprep.subr.mxu0 0.0
  %1492 = vmatpush1.msra.mxu0 0.0
  %1493 = vmatprep.subr.mxu0 0.0
  %1494 = vmatpush1.msra.mxu0 0.0
  %1495 = vmatprep.subr.mxu0 0.0
  %1496 = vmatpush1.msra.mxu0 0.0
  %1497 = vmatprep.subr.mxu0 0.0
  %1498 = vmatpush1.msra.mxu0 0.0
  %1499 = vmatprep.subr.mxu0 0.0
  %1500 = vmatpush1.msra.mxu0 0.0
  %1501 = vmatprep.subr.mxu0 0.0
  %1502 = vmatpush1.msra.mxu0 0.0
  %1503 = vmatprep.subr.mxu0 0.0
  %1504 = vmatpush1.msra.mxu0 0.0
  %1505 = vmatprep.subr.mxu0 0.0
  %1506 = vmatpush1.msra.mxu0 0.0
  %1507 = vmatprep.subr.mxu0 0.0
  %1508 = vmatpush1.msra.mxu0 0.0
  %1509 = vmatprep.subr.mxu0 0.0
  %1510 = vmatpush1.msra.mxu0 0.0
  %1511 = vmatprep.subr.mxu0 0.0
  %1512 = vmatpush1.msra.mxu0 0.0
  %1513 = vmatprep.subr.mxu0 0.0
  %1514 = vmatpush1.msra.mxu0 0.0
  %1515 = vmatprep.subr.mxu0 0.0
  %1516 = vmatpush1.msra.mxu0 0.0
  %1517 = vmatprep.subr.mxu0 0.0
  %1518 = vmatpush1.msra.mxu0 0.0
  %1519 = vmatprep.subr.mxu0 0.0
  %1520 = vmatpush1.msra.mxu0 0.0
  %1521 = vmatprep.subr.mxu0 0.0
  %1522 = vmatpush1.msra.mxu0 0.0
  %1523 = vmatprep.subr.mxu0 0.0
  %1524 = vmatpush1.msra.mxu0 0.0
  %1525 = vmatprep.subr.mxu0 0.0
  %1526 = vmatpush1.msra.mxu0 0.0
  %1527 = vmatprep.subr.mxu0 0.0
  %1528 = vmatpush1.msra.mxu0 0.0
  %1529 = vmatprep.subr.mxu0 0.0
  %1530 = vmatpush1.msra.mxu0 0.0
  %1531 = vmatprep.subr.mxu0 0.0
  %1532 = vmatpush1.msra.mxu0 0.0
  %1533 = vmatprep.subr.mxu0 0.0
  %1534 = vmatpush1.msra.mxu0 0.0
  %1535 = vmatprep.subr.mxu0 0.0
  %1536 = vmatpush1.msra.mxu0 0.0
  %1537 = vmatprep.mubr.f32.mxu0 0.0
  %1538 = vmatmul.mubr.f32.gmra.mrb[0].mxu0 %v1469
  %v1539 = vpop.f32.mrb[0].mxu0
  %v1540 = vadd.f32 0.0, %v1539
  %v1541 = vpop.f32.mrb[0].mxu0
  %1542 = vmatprep.mubr.f32.mxu0 0.0
  %1543 = vmatmul.mubr.f32.gmra.mrb[0].mxu0 %v1471
  %v1544 = vpop.f32.mrb[0].mxu0
  %v1545 = vadd.f32 0.0, %v1544
  %v1546 = vpop.f32.mrb[0].mxu0
  %1547 = vdwg.mxu0
  %1550 = vrot.lane.b32.xlu0 %v1540, 96
  %v1551 = vpop.permute.xlu0 %1550
  %1552 = vrot.lane.b32.xlu0 %v1545, 96
  %v1553 = vpop.permute.xlu0 %1552
  %v1556 = vsel %vm986, %v1540, %v1551
  %v1557 = vsel %vm987, %v1545, %v1553
  %v1558 = vadd.f32 %v1089, %v1556
  %v1559 = vadd.f32 %v1107, %v1557
  %v1560 = vxor.u32 %v1558, 2147483648
  %v1561 = vxor.u32 %v1559, 2147483648
  %v1562 = vmul.f32 %v1560, 1.442695
  %v1563 = vpow.pop %v1562
  %v1564 = vmul.f32 %v1561, 1.442695
  %v1565 = vpow.pop %v1564
  %v1566 = vadd.f32 %v1563, 1.0
  %v1567 = vadd.f32 %v1565, 1.0
  %v1568 = vrcp.pop %v1566
  %v1569 = vmul.f32 1.0, %v1568
  %v1570 = vrcp.pop %v1567
  %v1571 = vmul.f32 1.0, %v1570
  %v1572 = vtanh.pop %v1558
  %v1573 = vtanh.pop %v1559
  %v1574 = vmul.f32 %v1569, %v1443
  %v1575 = vmul.f32 %v1571, %v1444
  %1578 = vrot.lane.b32.xlu0 %v1572, 104
  %v1579 = vpop.permute.xlu0 %1578
  %1580 = vrot.lane.b32.xlu0 %v1573, 104
  %v1581 = vpop.permute.xlu0 %1580
  %v1584 = vmul.f32 %v1569, %v1579
  %v1585 = vmul.f32 %v1571, %v1581
  %1588 = vrot.lane.b32.xlu0 %v1584, 8
  %v1589 = vpop.permute.xlu0 %1588
  %1590 = vrot.lane.b32.xlu0 %v1585, 8
  %v1591 = vpop.permute.xlu0 %1590
  %v1594 = vadd.f32 %v1574, %v1589
  %v1595 = vadd.f32 %v1575, %v1591
  %v1596 = vtanh.pop %v1594
  %v1597 = vtanh.pop %v1595
  %1600 = vrot.lane.b32.xlu0 %v1596, 8
  %v1601 = vpop.permute.xlu0 %1600
  %1602 = vrot.lane.b32.xlu0 %v1597, 8
  %v1603 = vpop.permute.xlu0 %1602
  %v1606 = vmul.f32 %v1569, %v1601
  %v1607 = vmul.f32 %v1571, %v1603
  %1609 = vrot.lane.b32.xlu0 %v1606, 112
  %v1610 = vpop.permute.xlu0 %1609
  %1612 = vst.msk [vmem:[#allocation2 + $0x18] sm:$0xff] %vm1149, %v1610
  %1614 = vrot.lane.b32.xlu0 %v1607, 120
  %v1615 = vpop.permute.xlu0 %1614
  %1617 = vst.msk [vmem:[#allocation2] sm:$0xff] %vm1155, %v1615
  %v1618 = vld [vmem:[#allocation2] sm:$0xff]
  %v1619 = vld [vmem:[#allocation2 + $0x8] sm:$0xff]
  %v1620 = vld [vmem:[#allocation2 + $0x10] sm:$0xff]
  %v1621 = vld [vmem:[#allocation2 + $0x18] sm:$0xff]
  %v1622 = vld [vmem:[%s4 + $0x40] sm:$0xff]
  %v1623 = vld [vmem:[%s4 + $0x48] sm:$0xff]
  %v1624 = vld [vmem:[%s4 + $0xa5] sm:$0x1]
  %v1625 = vlaneseq
  %v1626 = vshrl.u32 %v1625, 7
  %v1627 = vsub.s32 0, %v1626
  %v1628 = vrot.slane %v1624, %v1627
  %v1630 = vsel %vm38, %v1618, 0
  %v1633 = vsel %vm38, %v1619, 0
  %v1636 = vsel %vm38, %v1620, 0
  %v1639 = vsel %vm38, %v1621, 0
  %1641 = vmatprep.subr.mxu0 0.0
  %1642 = vmatpush1.msra.mxu0 %v1622
  %1643 = vmatprep.subr.mxu0 0.0
  %1644 = vmatpush1.msra.mxu0 %v1623
  %1645 = vmatprep.subr.mxu0 0.0
  %1646 = vmatpush1.msra.mxu0 0.0
  %1647 = vmatprep.subr.mxu0 0.0
  %1648 = vmatpush1.msra.mxu0 0.0
  %1649 = vmatprep.subr.mxu0 0.0
  %1650 = vmatpush1.msra.mxu0 0.0
  %1651 = vmatprep.subr.mxu0 0.0
  %1652 = vmatpush1.msra.mxu0 0.0
  %1653 = vmatprep.subr.mxu0 0.0
  %1654 = vmatpush1.msra.mxu0 0.0
  %1655 = vmatprep.subr.mxu0 0.0
  %1656 = vmatpush1.msra.mxu0 0.0
  %1657 = vmatprep.subr.mxu0 0.0
  %1658 = vmatpush1.msra.mxu0 0.0
  %1659 = vmatprep.subr.mxu0 0.0
  %1660 = vmatpush1.msra.mxu0 0.0
  %1661 = vmatprep.subr.mxu0 0.0
  %1662 = vmatpush1.msra.mxu0 0.0
  %1663 = vmatprep.subr.mxu0 0.0
  %1664 = vmatpush1.msra.mxu0 0.0
  %1665 = vmatprep.subr.mxu0 0.0
  %1666 = vmatpush1.msra.mxu0 0.0
  %1667 = vmatprep.subr.mxu0 0.0
  %1668 = vmatpush1.msra.mxu0 0.0
  %1669 = vmatprep.subr.mxu0 0.0
  %1670 = vmatpush1.msra.mxu0 0.0
  %1671 = vmatprep.subr.mxu0 0.0
  %1672 = vmatpush1.msra.mxu0 0.0
  %1673 = vmatprep.subr.mxu0 0.0
  %1674 = vmatpush1.msra.mxu0 0.0
  %1675 = vmatprep.subr.mxu0 0.0
  %1676 = vmatpush1.msra.mxu0 0.0
  %1677 = vmatprep.subr.mxu0 0.0
  %1678 = vmatpush1.msra.mxu0 0.0
  %1679 = vmatprep.subr.mxu0 0.0
  %1680 = vmatpush1.msra.mxu0 0.0
  %1681 = vmatprep.subr.mxu0 0.0
  %1682 = vmatpush1.msra.mxu0 0.0
  %1683 = vmatprep.subr.mxu0 0.0
  %1684 = vmatpush1.msra.mxu0 0.0
  %1685 = vmatprep.subr.mxu0 0.0
  %1686 = vmatpush1.msra.mxu0 0.0
  %1687 = vmatprep.subr.mxu0 0.0
  %1688 = vmatpush1.msra.mxu0 0.0
  %1689 = vmatprep.subr.mxu0 0.0
  %1690 = vmatpush1.msra.mxu0 0.0
  %1691 = vmatprep.subr.mxu0 0.0
  %1692 = vmatpush1.msra.mxu0 0.0
  %1693 = vmatprep.subr.mxu0 0.0
  %1694 = vmatpush1.msra.mxu0 0.0
  %1695 = vmatprep.subr.mxu0 0.0
  %1696 = vmatpush1.msra.mxu0 0.0
  %1697 = vmatprep.subr.mxu0 0.0
  %1698 = vmatpush1.msra.mxu0 0.0
  %1699 = vmatprep.subr.mxu0 0.0
  %1700 = vmatpush1.msra.mxu0 0.0
  %1701 = vmatprep.subr.mxu0 0.0
  %1702 = vmatpush1.msra.mxu0 0.0
  %1703 = vmatprep.subr.mxu0 0.0
  %1704 = vmatpush1.msra.mxu0 0.0
  %1705 = vmatprep.mubr.f32.mxu0 0.0
  %1706 = vmatmul.mubr.f32.gmra.mrb[0].mxu0 %v1630
  %v1707 = vpop.f32.mrb[0].mxu0
  %v1708 = vadd.f32 %v1628, %v1707
  %v1709 = vpop.f32.mrb[0].mxu0
  %1710 = vmatprep.mubr.f32.mxu0 0.0
  %1711 = vmatmul.mubr.f32.gmra.mrb[0].mxu0 %v1633
  %v1712 = vpop.f32.mrb[0].mxu0
  %v1713 = vadd.f32 %v1628, %v1712
  %v1714 = vpop.f32.mrb[0].mxu0
  %1715 = vmatprep.mubr.f32.mxu0 0.0
  %1716 = vmatmul.mubr.f32.gmra.mrb[0].mxu0 %v1636
  %v1717 = vpop.f32.mrb[0].mxu0
  %v1718 = vadd.f32 %v1628, %v1717
  %v1719 = vpop.f32.mrb[0].mxu0
  %1720 = vmatprep.mubr.f32.mxu0 0.0
  %1721 = vmatmul.mubr.f32.gmra.mrb[0].mxu0 %v1639
  %v1722 = vpop.f32.mrb[0].mxu0
  %v1723 = vadd.f32 %v1628, %v1722
  %v1724 = vpop.f32.mrb[0].mxu0
  %1725 = vdwg.mxu0
  %v1726 = vld [vmem:[%s4 + $0x58] sm:$0xff]
  %1728 = vrot.lane.b32.xlu0 %v1723, 96
  %v1729 = vpop.permute.xlu0 %1728
  %1732 = vrot.lane.b32.xlu0 %v1718, 96
  %v1733 = vpop.permute.xlu0 %1732
  %1736 = vrot.lane.b32.xlu0 %v1713, 96
  %v1737 = vpop.permute.xlu0 %1736
  %1740 = vrot.lane.b32.xlu0 %v1708, 96
  %v1741 = vpop.permute.xlu0 %1740
  %v1743 = vxor.u32 %v1708, 2147483648
  %v1744 = vxor.u32 %v1729, 2147483648
  %v1745 = vmul.f32 %v1743, 1.442695
  %v1746 = vpow.pop %v1745
  %v1747 = vmul.f32 %v1744, 1.442695
  %v1748 = vpow.pop %v1747
  %v1749 = vadd.f32 %v1746, 1.0
  %v1750 = vadd.f32 %v1748, 1.0
  %v1751 = vrcp.pop %v1749
  %v1752 = vmul.f32 1.0, %v1751
  %v1753 = vrcp.pop %v1750
  %v1754 = vmul.f32 1.0, %v1753
  %v1755 = vtanh.pop %v1708
  %v1756 = vtanh.pop %v1729
  %1759 = vrot.lane.b32.xlu0 %v1755, 104
  %v1760 = vpop.permute.xlu0 %1759
  %1761 = vrot.lane.b32.xlu0 %v1756, 104
  %v1762 = vpop.permute.xlu0 %1761
  %v1765 = vmul.f32 %v1752, %v1760
  %v1766 = vmul.f32 %v1754, %v1762
  %v1767 = vtanh.pop %v1765
  %v1768 = vtanh.pop %v1766
  %1771 = vrot.lane.b32.xlu0 %v1767, 16
  %v1772 = vpop.permute.xlu0 %1771
  %1773 = vrot.lane.b32.xlu0 %v1768, 16
  %v1774 = vpop.permute.xlu0 %1773
  %v1777 = vmul.f32 %v1752, %v1772
  %v1778 = vmul.f32 %v1754, %v1774
  %1781 = vrot.lane.b32.xlu0 %v1777, 112
  %v1782 = vpop.permute.xlu0 %1781
  %1783 = vrot.lane.b32.xlu0 %v1778, 112
  %v1784 = vpop.permute.xlu0 %1783
  %v1785 = vsel %vm1149, %v1782, 0
  %v1787 = vsel %vm1149, %v1784, 0
  %1789 = vmatprep.subr.mxu0 0.0
  %1790 = vmatpush1.msra.mxu0 %v1726
  %1791 = vmatprep.subr.mxu0 0.0
  %1792 = vmatpush1.msra.mxu0 0.0
  %1793 = vmatprep.subr.mxu0 0.0
  %1794 = vmatpush1.msra.mxu0 0.0
  %1795 = vmatprep.subr.mxu0 0.0
  %1796 = vmatpush1.msra.mxu0 0.0
  %1797 = vmatprep.subr.mxu0 0.0
  %1798 = vmatpush1.msra.mxu0 0.0
  %1799 = vmatprep.subr.mxu0 0.0
  %1800 = vmatpush1.msra.mxu0 0.0
  %1801 = vmatprep.subr.mxu0 0.0
  %1802 = vmatpush1.msra.mxu0 0.0
  %1803 = vmatprep.subr.mxu0 0.0
  %1804 = vmatpush1.msra.mxu0 0.0
  %1805 = vmatprep.subr.mxu0 0.0
  %1806 = vmatpush1.msra.mxu0 0.0
  %1807 = vmatprep.subr.mxu0 0.0
  %1808 = vmatpush1.msra.mxu0 0.0
  %1809 = vmatprep.subr.mxu0 0.0
  %1810 = vmatpush1.msra.mxu0 0.0
  %1811 = vmatprep.subr.mxu0 0.0
  %1812 = vmatpush1.msra.mxu0 0.0
  %1813 = vmatprep.subr.mxu0 0.0
  %1814 = vmatpush1.msra.mxu0 0.0
  %1815 = vmatprep.subr.mxu0 0.0
  %1816 = vmatpush1.msra.mxu0 0.0
  %1817 = vmatprep.subr.mxu0 0.0
  %1818 = vmatpush1.msra.mxu0 0.0
  %1819 = vmatprep.subr.mxu0 0.0
  %1820 = vmatpush1.msra.mxu0 0.0
  %1821 = vmatprep.subr.mxu0 0.0
  %1822 = vmatpush1.msra.mxu0 0.0
  %1823 = vmatprep.subr.mxu0 0.0
  %1824 = vmatpush1.msra.mxu0 0.0
  %1825 = vmatprep.subr.mxu0 0.0
  %1826 = vmatpush1.msra.mxu0 0.0
  %1827 = vmatprep.subr.mxu0 0.0
  %1828 = vmatpush1.msra.mxu0 0.0
  %1829 = vmatprep.subr.mxu0 0.0
  %1830 = vmatpush1.msra.mxu0 0.0
  %1831 = vmatprep.subr.mxu0 0.0
  %1832 = vmatpush1.msra.mxu0 0.0
  %1833 = vmatprep.subr.mxu0 0.0
  %1834 = vmatpush1.msra.mxu0 0.0
  %1835 = vmatprep.subr.mxu0 0.0
  %1836 = vmatpush1.msra.mxu0 0.0
  %1837 = vmatprep.subr.mxu0 0.0
  %1838 = vmatpush1.msra.mxu0 0.0
  %1839 = vmatprep.subr.mxu0 0.0
  %1840 = vmatpush1.msra.mxu0 0.0
  %1841 = vmatprep.subr.mxu0 0.0
  %1842 = vmatpush1.msra.mxu0 0.0
  %1843 = vmatprep.subr.mxu0 0.0
  %1844 = vmatpush1.msra.mxu0 0.0
  %1845 = vmatprep.subr.mxu0 0.0
  %1846 = vmatpush1.msra.mxu0 0.0
  %1847 = vmatprep.subr.mxu0 0.0
  %1848 = vmatpush1.msra.mxu0 0.0
  %1849 = vmatprep.subr.mxu0 0.0
  %1850 = vmatpush1.msra.mxu0 0.0
  %1851 = vmatprep.subr.mxu0 0.0
  %1852 = vmatpush1.msra.mxu0 0.0
  %1853 = vmatprep.mubr.f32.mxu0 0.0
  %1854 = vmatmul.mubr.f32.gmra.mrb[0].mxu0 %v1785
  %v1855 = vpop.f32.mrb[0].mxu0
  %v1856 = vadd.f32 0.0, %v1855
  %v1857 = vpop.f32.mrb[0].mxu0
  %1858 = vmatprep.mubr.f32.mxu0 0.0
  %1859 = vmatmul.mubr.f32.gmra.mrb[0].mxu0 %v1787
  %v1860 = vpop.f32.mrb[0].mxu0
  %v1861 = vadd.f32 0.0, %v1860
  %v1862 = vpop.f32.mrb[0].mxu0
  %1863 = vdwg.mxu0
  %1866 = vrot.lane.b32.xlu0 %v1856, 96
  %v1867 = vpop.permute.xlu0 %1866
  %1868 = vrot.lane.b32.xlu0 %v1861, 96
  %v1869 = vpop.permute.xlu0 %1868
  %v1872 = vsel %vm986, %v1856, %v1867
  %v1873 = vsel %vm987, %v1861, %v1869
  %v1874 = vadd.f32 %v1713, %v1872
  %v1875 = vadd.f32 %v1733, %v1873
  %v1876 = vxor.u32 %v1874, 2147483648
  %v1877 = vxor.u32 %v1875, 2147483648
  %v1878 = vmul.f32 %v1876, 1.442695
  %v1879 = vpow.pop %v1878
  %v1880 = vmul.f32 %v1877, 1.442695
  %v1881 = vpow.pop %v1880
  %v1882 = vadd.f32 %v1879, 1.0
  %v1883 = vadd.f32 %v1881, 1.0
  %v1884 = vrcp.pop %v1882
  %v1885 = vmul.f32 1.0, %v1884
  %v1886 = vrcp.pop %v1883
  %v1887 = vmul.f32 1.0, %v1886
  %v1888 = vtanh.pop %v1874
  %v1889 = vtanh.pop %v1875
  %1892 = vrot.lane.b32.xlu0 %v1765, 8
  %v1893 = vpop.permute.xlu0 %1892
  %1894 = vrot.lane.b32.xlu0 %v1766, 8
  %v1895 = vpop.permute.xlu0 %1894
  %v1898 = vmul.f32 %v1885, %v1893
  %v1899 = vmul.f32 %v1887, %v1895
  %1902 = vrot.lane.b32.xlu0 %v1888, 104
  %v1903 = vpop.permute.xlu0 %1902
  %1904 = vrot.lane.b32.xlu0 %v1889, 104
  %v1905 = vpop.permute.xlu0 %1904
  %v1908 = vmul.f32 %v1885, %v1903
  %v1909 = vmul.f32 %v1887, %v1905
  %1912 = vrot.lane.b32.xlu0 %v1908, 8
  %v1913 = vpop.permute.xlu0 %1912
  %1914 = vrot.lane.b32.xlu0 %v1909, 8
  %v1915 = vpop.permute.xlu0 %1914
  %v1918 = vadd.f32 %v1898, %v1913
  %v1919 = vadd.f32 %v1899, %v1915
  %v1920 = vtanh.pop %v1918
  %v1921 = vtanh.pop %v1919
  %1924 = vrot.lane.b32.xlu0 %v1920, 8
  %v1925 = vpop.permute.xlu0 %1924
  %1926 = vrot.lane.b32.xlu0 %v1921, 8
  %v1927 = vpop.permute.xlu0 %1926
  %v1930 = vmul.f32 %v1885, %v1925
  %v1931 = vmul.f32 %v1887, %v1927
  %1934 = vrot.lane.b32.xlu0 %v1930, 112
  %v1935 = vpop.permute.xlu0 %1934
  %1936 = vrot.lane.b32.xlu0 %v1931, 112
  %v1937 = vpop.permute.xlu0 %1936
  %v1938 = vsel %vm1149, %v1935, 0
  %v1940 = vsel %vm1149, %v1937, 0
  %1942 = vmatprep.subr.mxu0 0.0
  %1943 = vmatpush1.msra.mxu0 %v1726
  %1944 = vmatprep.subr.mxu0 0.0
  %1945 = vmatpush1.msra.mxu0 0.0
  %1946 = vmatprep.subr.mxu0 0.0
  %1947 = vmatpush1.msra.mxu0 0.0
  %1948 = vmatprep.subr.mxu0 0.0
  %1949 = vmatpush1.msra.mxu0 0.0
  %1950 = vmatprep.subr.mxu0 0.0
  %1951 = vmatpush1.msra.mxu0 0.0
  %1952 = vmatprep.subr.mxu0 0.0
  %1953 = vmatpush1.msra.mxu0 0.0
  %1954 = vmatprep.subr.mxu0 0.0
  %1955 = vmatpush1.msra.mxu0 0.0
  %1956 = vmatprep.subr.mxu0 0.0
  %1957 = vmatpush1.msra.mxu0 0.0
  %1958 = vmatprep.subr.mxu0 0.0
  %1959 = vmatpush1.msra.mxu0 0.0
  %1960 = vmatprep.subr.mxu0 0.0
  %1961 = vmatpush1.msra.mxu0 0.0
  %1962 = vmatprep.subr.mxu0 0.0
  %1963 = vmatpush1.msra.mxu0 0.0
  %1964 = vmatprep.subr.mxu0 0.0
  %1965 = vmatpush1.msra.mxu0 0.0
  %1966 = vmatprep.subr.mxu0 0.0
  %1967 = vmatpush1.msra.mxu0 0.0
  %1968 = vmatprep.subr.mxu0 0.0
  %1969 = vmatpush1.msra.mxu0 0.0
  %1970 = vmatprep.subr.mxu0 0.0
  %1971 = vmatpush1.msra.mxu0 0.0
  %1972 = vmatprep.subr.mxu0 0.0
  %1973 = vmatpush1.msra.mxu0 0.0
  %1974 = vmatprep.subr.mxu0 0.0
  %1975 = vmatpush1.msra.mxu0 0.0
  %1976 = vmatprep.subr.mxu0 0.0
  %1977 = vmatpush1.msra.mxu0 0.0
  %1978 = vmatprep.subr.mxu0 0.0
  %1979 = vmatpush1.msra.mxu0 0.0
  %1980 = vmatprep.subr.mxu0 0.0
  %1981 = vmatpush1.msra.mxu0 0.0
  %1982 = vmatprep.subr.mxu0 0.0
  %1983 = vmatpush1.msra.mxu0 0.0
  %1984 = vmatprep.subr.mxu0 0.0
  %1985 = vmatpush1.msra.mxu0 0.0
  %1986 = vmatprep.subr.mxu0 0.0
  %1987 = vmatpush1.msra.mxu0 0.0
  %1988 = vmatprep.subr.mxu0 0.0
  %1989 = vmatpush1.msra.mxu0 0.0
  %1990 = vmatprep.subr.mxu0 0.0
  %1991 = vmatpush1.msra.mxu0 0.0
  %1992 = vmatprep.subr.mxu0 0.0
  %1993 = vmatpush1.msra.mxu0 0.0
  %1994 = vmatprep.subr.mxu0 0.0
  %1995 = vmatpush1.msra.mxu0 0.0
  %1996 = vmatprep.subr.mxu0 0.0
  %1997 = vmatpush1.msra.mxu0 0.0
  %1998 = vmatprep.subr.mxu0 0.0
  %1999 = vmatpush1.msra.mxu0 0.0
  %2000 = vmatprep.subr.mxu0 0.0
  %2001 = vmatpush1.msra.mxu0 0.0
  %2002 = vmatprep.subr.mxu0 0.0
  %2003 = vmatpush1.msra.mxu0 0.0
  %2004 = vmatprep.subr.mxu0 0.0
  %2005 = vmatpush1.msra.mxu0 0.0
  %2006 = vmatprep.mubr.f32.mxu0 0.0
  %2007 = vmatmul.mubr.f32.gmra.mrb[0].mxu0 %v1938
  %v2008 = vpop.f32.mrb[0].mxu0
  %v2009 = vadd.f32 0.0, %v2008
  %v2010 = vpop.f32.mrb[0].mxu0
  %2011 = vmatprep.mubr.f32.mxu0 0.0
  %2012 = vmatmul.mubr.f32.gmra.mrb[0].mxu0 %v1940
  %v2013 = vpop.f32.mrb[0].mxu0
  %v2014 = vadd.f32 0.0, %v2013
  %v2015 = vpop.f32.mrb[0].mxu0
  %2016 = vdwg.mxu0
  %2019 = vrot.lane.b32.xlu0 %v2009, 96
  %v2020 = vpop.permute.xlu0 %2019
  %2021 = vrot.lane.b32.xlu0 %v2014, 96
  %v2022 = vpop.permute.xlu0 %2021
  %v2025 = vsel %vm986, %v2009, %v2020
  %v2026 = vsel %vm987, %v2014, %v2022
  %v2027 = vadd.f32 %v1718, %v2025
  %v2028 = vadd.f32 %v1737, %v2026
  %v2029 = vxor.u32 %v2027, 2147483648
  %v2030 = vxor.u32 %v2028, 2147483648
  %v2031 = vmul.f32 %v2029, 1.442695
  %v2032 = vpow.pop %v2031
  %v2033 = vmul.f32 %v2030, 1.442695
  %v2034 = vpow.pop %v2033
  %v2035 = vadd.f32 %v2032, 1.0
  %v2036 = vadd.f32 %v2034, 1.0
  %v2037 = vrcp.pop %v2035
  %v2038 = vmul.f32 1.0, %v2037
  %v2039 = vrcp.pop %v2036
  %v2040 = vmul.f32 1.0, %v2039
  %v2041 = vtanh.pop %v2027
  %v2042 = vtanh.pop %v2028
  %v2043 = vmul.f32 %v2038, %v1918
  %v2044 = vmul.f32 %v2040, %v1919
  %2047 = vrot.lane.b32.xlu0 %v2041, 104
  %v2048 = vpop.permute.xlu0 %2047
  %2049 = vrot.lane.b32.xlu0 %v2042, 104
  %v2050 = vpop.permute.xlu0 %2049
  %v2053 = vmul.f32 %v2038, %v2048
  %v2054 = vmul.f32 %v2040, %v2050
  %2057 = vrot.lane.b32.xlu0 %v2053, 8
  %v2058 = vpop.permute.xlu0 %2057
  %2059 = vrot.lane.b32.xlu0 %v2054, 8
  %v2060 = vpop.permute.xlu0 %2059
  %v2063 = vadd.f32 %v2043, %v2058
  %v2064 = vadd.f32 %v2044, %v2060
  %v2065 = vtanh.pop %v2063
  %v2066 = vtanh.pop %v2064
  %2069 = vrot.lane.b32.xlu0 %v2065, 8
  %v2070 = vpop.permute.xlu0 %2069
  %2071 = vrot.lane.b32.xlu0 %v2066, 8
  %v2072 = vpop.permute.xlu0 %2071
  %v2075 = vmul.f32 %v2038, %v2070
  %v2076 = vmul.f32 %v2040, %v2072
  %2079 = vrot.lane.b32.xlu0 %v2075, 112
  %v2080 = vpop.permute.xlu0 %2079
  %2081 = vrot.lane.b32.xlu0 %v2076, 112
  %v2082 = vpop.permute.xlu0 %2081
  %v2083 = vsel %vm1149, %v2080, 0
  %v2085 = vsel %vm1149, %v2082, 0
  %2087 = vmatprep.subr.mxu0 0.0
  %2088 = vmatpush1.msra.mxu0 %v1726
  %2089 = vmatprep.subr.mxu0 0.0
  %2090 = vmatpush1.msra.mxu0 0.0
  %2091 = vmatprep.subr.mxu0 0.0
  %2092 = vmatpush1.msra.mxu0 0.0
  %2093 = vmatprep.subr.mxu0 0.0
  %2094 = vmatpush1.msra.mxu0 0.0
  %2095 = vmatprep.subr.mxu0 0.0
  %2096 = vmatpush1.msra.mxu0 0.0
  %2097 = vmatprep.subr.mxu0 0.0
  %2098 = vmatpush1.msra.mxu0 0.0
  %2099 = vmatprep.subr.mxu0 0.0
  %2100 = vmatpush1.msra.mxu0 0.0
  %2101 = vmatprep.subr.mxu0 0.0
  %2102 = vmatpush1.msra.mxu0 0.0
  %2103 = vmatprep.subr.mxu0 0.0
  %2104 = vmatpush1.msra.mxu0 0.0
  %2105 = vmatprep.subr.mxu0 0.0
  %2106 = vmatpush1.msra.mxu0 0.0
  %2107 = vmatprep.subr.mxu0 0.0
  %2108 = vmatpush1.msra.mxu0 0.0
  %2109 = vmatprep.subr.mxu0 0.0
  %2110 = vmatpush1.msra.mxu0 0.0
  %2111 = vmatprep.subr.mxu0 0.0
  %2112 = vmatpush1.msra.mxu0 0.0
  %2113 = vmatprep.subr.mxu0 0.0
  %2114 = vmatpush1.msra.mxu0 0.0
  %2115 = vmatprep.subr.mxu0 0.0
  %2116 = vmatpush1.msra.mxu0 0.0
  %2117 = vmatprep.subr.mxu0 0.0
  %2118 = vmatpush1.msra.mxu0 0.0
  %2119 = vmatprep.subr.mxu0 0.0
  %2120 = vmatpush1.msra.mxu0 0.0
  %2121 = vmatprep.subr.mxu0 0.0
  %2122 = vmatpush1.msra.mxu0 0.0
  %2123 = vmatprep.subr.mxu0 0.0
  %2124 = vmatpush1.msra.mxu0 0.0
  %2125 = vmatprep.subr.mxu0 0.0
  %2126 = vmatpush1.msra.mxu0 0.0
  %2127 = vmatprep.subr.mxu0 0.0
  %2128 = vmatpush1.msra.mxu0 0.0
  %2129 = vmatprep.subr.mxu0 0.0
  %2130 = vmatpush1.msra.mxu0 0.0
  %2131 = vmatprep.subr.mxu0 0.0
  %2132 = vmatpush1.msra.mxu0 0.0
  %2133 = vmatprep.subr.mxu0 0.0
  %2134 = vmatpush1.msra.mxu0 0.0
  %2135 = vmatprep.subr.mxu0 0.0
  %2136 = vmatpush1.msra.mxu0 0.0
  %2137 = vmatprep.subr.mxu0 0.0
  %2138 = vmatpush1.msra.mxu0 0.0
  %2139 = vmatprep.subr.mxu0 0.0
  %2140 = vmatpush1.msra.mxu0 0.0
  %2141 = vmatprep.subr.mxu0 0.0
  %2142 = vmatpush1.msra.mxu0 0.0
  %2143 = vmatprep.subr.mxu0 0.0
  %2144 = vmatpush1.msra.mxu0 0.0
  %2145 = vmatprep.subr.mxu0 0.0
  %2146 = vmatpush1.msra.mxu0 0.0
  %2147 = vmatprep.subr.mxu0 0.0
  %2148 = vmatpush1.msra.mxu0 0.0
  %2149 = vmatprep.subr.mxu0 0.0
  %2150 = vmatpush1.msra.mxu0 0.0
  %2151 = vmatprep.mubr.f32.mxu0 0.0
  %2152 = vmatmul.mubr.f32.gmra.mrb[0].mxu0 %v2083
  %v2153 = vpop.f32.mrb[0].mxu0
  %v2154 = vadd.f32 0.0, %v2153
  %v2155 = vpop.f32.mrb[0].mxu0
  %2156 = vmatprep.mubr.f32.mxu0 0.0
  %2157 = vmatmul.mubr.f32.gmra.mrb[0].mxu0 %v2085
  %v2158 = vpop.f32.mrb[0].mxu0
  %v2159 = vadd.f32 0.0, %v2158
  %v2160 = vpop.f32.mrb[0].mxu0
  %2161 = vdwg.mxu0
  %2164 = vrot.lane.b32.xlu0 %v2154, 96
  %v2165 = vpop.permute.xlu0 %2164
  %2166 = vrot.lane.b32.xlu0 %v2159, 96
  %v2167 = vpop.permute.xlu0 %2166
  %v2170 = vsel %vm986, %v2154, %v2165
  %v2171 = vsel %vm987, %v2159, %v2167
  %v2172 = vadd.f32 %v1723, %v2170
  %v2173 = vadd.f32 %v1741, %v2171
  %v2174 = vxor.u32 %v2172, 2147483648
  %v2175 = vxor.u32 %v2173, 2147483648
  %v2176 = vmul.f32 %v2174, 1.442695
  %v2177 = vpow.pop %v2176
  %v2178 = vmul.f32 %v2175, 1.442695
  %v2179 = vpow.pop %v2178
  %v2180 = vadd.f32 %v2177, 1.0
  %v2181 = vadd.f32 %v2179, 1.0
  %v2182 = vrcp.pop %v2180
  %v2183 = vmul.f32 1.0, %v2182
  %v2184 = vrcp.pop %v2181
  %v2185 = vmul.f32 1.0, %v2184
  %v2186 = vtanh.pop %v2172
  %v2187 = vtanh.pop %v2173
  %v2188 = vmul.f32 %v2183, %v2063
  %v2189 = vmul.f32 %v2185, %v2064
  %2192 = vrot.lane.b32.xlu0 %v2186, 104
  %v2193 = vpop.permute.xlu0 %2192
  %2194 = vrot.lane.b32.xlu0 %v2187, 104
  %v2195 = vpop.permute.xlu0 %2194
  %v2198 = vmul.f32 %v2183, %v2193
  %v2199 = vmul.f32 %v2185, %v2195
  %2202 = vrot.lane.b32.xlu0 %v2198, 8
  %v2203 = vpop.permute.xlu0 %2202
  %2204 = vrot.lane.b32.xlu0 %v2199, 8
  %v2205 = vpop.permute.xlu0 %2204
  %v2208 = vadd.f32 %v2188, %v2203
  %v2209 = vadd.f32 %v2189, %v2205
  %v2210 = vtanh.pop %v2208
  %v2211 = vtanh.pop %v2209
  %2214 = vrot.lane.b32.xlu0 %v2210, 8
  %v2215 = vpop.permute.xlu0 %2214
  %2216 = vrot.lane.b32.xlu0 %v2211, 8
  %v2217 = vpop.permute.xlu0 %2216
  %v2220 = vmul.f32 %v2183, %v2215
  %v2221 = vmul.f32 %v2185, %v2217
  %2223 = vrot.lane.b32.xlu0 %v2220, 112
  %v2224 = vpop.permute.xlu0 %2223
  %2227 = vrot.lane.b32.xlu0 %v2221, 120
  %v2228 = vpop.permute.xlu0 %2227
  %v2230 = vsel %vm1149, %v2224, %v2228
  %v2231 = vld [vmem:[%s2] sm:$0xff]
  %v2232 = vld [vmem:[%s4 + $0x60] sm:$0xff]
  %v2233 = vld [vmem:[%s4 + $0xa6] sm:$0x1]
  %v2234 = vlaneseq
  %v2235 = vshrl.u32 %v2234, 7
  %v2236 = vsub.s32 0, %v2235
  %v2237 = vrot.slane %v2233, %v2236
  %v2239 = vsel %vm1149, %v2231, 0
  %2241 = vmatprep.subr.mxu0 0.0
  %2242 = vmatpush1.msra.mxu0 %v2232
  %2243 = vmatprep.subr.mxu0 0.0
  %2244 = vmatpush1.msra.mxu0 0.0
  %2245 = vmatprep.subr.mxu0 0.0
  %2246 = vmatpush1.msra.mxu0 0.0
  %2247 = vmatprep.subr.mxu0 0.0
  %2248 = vmatpush1.msra.mxu0 0.0
  %2249 = vmatprep.subr.mxu0 0.0
  %2250 = vmatpush1.msra.mxu0 0.0
  %2251 = vmatprep.subr.mxu0 0.0
  %2252 = vmatpush1.msra.mxu0 0.0
  %2253 = vmatprep.subr.mxu0 0.0
  %2254 = vmatpush1.msra.mxu0 0.0
  %2255 = vmatprep.subr.mxu0 0.0
  %2256 = vmatpush1.msra.mxu0 0.0
  %2257 = vmatprep.subr.mxu0 0.0
  %2258 = vmatpush1.msra.mxu0 0.0
  %2259 = vmatprep.subr.mxu0 0.0
  %2260 = vmatpush1.msra.mxu0 0.0
  %2261 = vmatprep.subr.mxu0 0.0
  %2262 = vmatpush1.msra.mxu0 0.0
  %2263 = vmatprep.subr.mxu0 0.0
  %2264 = vmatpush1.msra.mxu0 0.0
  %2265 = vmatprep.subr.mxu0 0.0
  %2266 = vmatpush1.msra.mxu0 0.0
  %2267 = vmatprep.subr.mxu0 0.0
  %2268 = vmatpush1.msra.mxu0 0.0
  %2269 = vmatprep.subr.mxu0 0.0
  %2270 = vmatpush1.msra.mxu0 0.0
  %2271 = vmatprep.subr.mxu0 0.0
  %2272 = vmatpush1.msra.mxu0 0.0
  %2273 = vmatprep.subr.mxu0 0.0
  %2274 = vmatpush1.msra.mxu0 0.0
  %2275 = vmatprep.subr.mxu0 0.0
  %2276 = vmatpush1.msra.mxu0 0.0
  %2277 = vmatprep.subr.mxu0 0.0
  %2278 = vmatpush1.msra.mxu0 0.0
  %2279 = vmatprep.subr.mxu0 0.0
  %2280 = vmatpush1.msra.mxu0 0.0
  %2281 = vmatprep.subr.mxu0 0.0
  %2282 = vmatpush1.msra.mxu0 0.0
  %2283 = vmatprep.subr.mxu0 0.0
  %2284 = vmatpush1.msra.mxu0 0.0
  %2285 = vmatprep.subr.mxu0 0.0
  %2286 = vmatpush1.msra.mxu0 0.0
  %2287 = vmatprep.subr.mxu0 0.0
  %2288 = vmatpush1.msra.mxu0 0.0
  %2289 = vmatprep.subr.mxu0 0.0
  %2290 = vmatpush1.msra.mxu0 0.0
  %2291 = vmatprep.subr.mxu0 0.0
  %2292 = vmatpush1.msra.mxu0 0.0
  %2293 = vmatprep.subr.mxu0 0.0
  %2294 = vmatpush1.msra.mxu0 0.0
  %2295 = vmatprep.subr.mxu0 0.0
  %2296 = vmatpush1.msra.mxu0 0.0
  %2297 = vmatprep.subr.mxu0 0.0
  %2298 = vmatpush1.msra.mxu0 0.0
  %2299 = vmatprep.subr.mxu0 0.0
  %2300 = vmatpush1.msra.mxu0 0.0
  %2301 = vmatprep.subr.mxu0 0.0
  %2302 = vmatpush1.msra.mxu0 0.0
  %2303 = vmatprep.subr.mxu0 0.0
  %2304 = vmatpush1.msra.mxu0 0.0
  %2305 = vmatprep.mubr.f32.mxu0 0.0
  %2306 = vmatmul.mubr.f32.gmra.mrb[0].mxu0 %v2239
  %v2307 = vpop.f32.mrb[0].mxu0
  %v2308 = vadd.f32 %v2237, %v2307
  %v2309 = vpop.f32.mrb[0].mxu0
  %2310 = vdwg.mxu0
  %v2311 = vmax.f32 %v2308, 0.0
  %v2312 = vld [vmem:[%s4 + $0x68] sm:$0xff]
  %v2313 = vld [vmem:[%s4 + $0x70] sm:$0xff]
  %v2314 = vld [vmem:[%s4 + $0xa7] sm:$0x1]
  %v2315 = vlaneseq
  %v2316 = vshrl.u32 %v2315, 7
  %v2317 = vsub.s32 0, %v2316
  %v2318 = vrot.slane %v2314, %v2317
  %v2320 = vsel %vm38, %v2311, 0
  %2322 = vmatprep.subr.mxu0 0.0
  %2323 = vmatpush1.msra.mxu0 %v2312
  %2324 = vmatprep.subr.mxu0 0.0
  %2325 = vmatpush1.msra.mxu0 %v2313
  %2326 = vmatprep.subr.mxu0 0.0
  %2327 = vmatpush1.msra.mxu0 0.0
  %2328 = vmatprep.subr.mxu0 0.0
  %2329 = vmatpush1.msra.mxu0 0.0
  %2330 = vmatprep.subr.mxu0 0.0
  %2331 = vmatpush1.msra.mxu0 0.0
  %2332 = vmatprep.subr.mxu0 0.0
  %2333 = vmatpush1.msra.mxu0 0.0
  %2334 = vmatprep.subr.mxu0 0.0
  %2335 = vmatpush1.msra.mxu0 0.0
  %2336 = vmatprep.subr.mxu0 0.0
  %2337 = vmatpush1.msra.mxu0 0.0
  %2338 = vmatprep.subr.mxu0 0.0
  %2339 = vmatpush1.msra.mxu0 0.0
  %2340 = vmatprep.subr.mxu0 0.0
  %2341 = vmatpush1.msra.mxu0 0.0
  %2342 = vmatprep.subr.mxu0 0.0
  %2343 = vmatpush1.msra.mxu0 0.0
  %2344 = vmatprep.subr.mxu0 0.0
  %2345 = vmatpush1.msra.mxu0 0.0
  %2346 = vmatprep.subr.mxu0 0.0
  %2347 = vmatpush1.msra.mxu0 0.0
  %2348 = vmatprep.subr.mxu0 0.0
  %2349 = vmatpush1.msra.mxu0 0.0
  %2350 = vmatprep.subr.mxu0 0.0
  %2351 = vmatpush1.msra.mxu0 0.0
  %2352 = vmatprep.subr.mxu0 0.0
  %2353 = vmatpush1.msra.mxu0 0.0
  %2354 = vmatprep.subr.mxu0 0.0
  %2355 = vmatpush1.msra.mxu0 0.0
  %2356 = vmatprep.subr.mxu0 0.0
  %2357 = vmatpush1.msra.mxu0 0.0
  %2358 = vmatprep.subr.mxu0 0.0
  %2359 = vmatpush1.msra.mxu0 0.0
  %2360 = vmatprep.subr.mxu0 0.0
  %2361 = vmatpush1.msra.mxu0 0.0
  %2362 = vmatprep.subr.mxu0 0.0
  %2363 = vmatpush1.msra.mxu0 0.0
  %2364 = vmatprep.subr.mxu0 0.0
  %2365 = vmatpush1.msra.mxu0 0.0
  %2366 = vmatprep.subr.mxu0 0.0
  %2367 = vmatpush1.msra.mxu0 0.0
  %2368 = vmatprep.subr.mxu0 0.0
  %2369 = vmatpush1.msra.mxu0 0.0
  %2370 = vmatprep.subr.mxu0 0.0
  %2371 = vmatpush1.msra.mxu0 0.0
  %2372 = vmatprep.subr.mxu0 0.0
  %2373 = vmatpush1.msra.mxu0 0.0
  %2374 = vmatprep.subr.mxu0 0.0
  %2375 = vmatpush1.msra.mxu0 0.0
  %2376 = vmatprep.subr.mxu0 0.0
  %2377 = vmatpush1.msra.mxu0 0.0
  %2378 = vmatprep.subr.mxu0 0.0
  %2379 = vmatpush1.msra.mxu0 0.0
  %2380 = vmatprep.subr.mxu0 0.0
  %2381 = vmatpush1.msra.mxu0 0.0
  %2382 = vmatprep.subr.mxu0 0.0
  %2383 = vmatpush1.msra.mxu0 0.0
  %2384 = vmatprep.subr.mxu0 0.0
  %2385 = vmatpush1.msra.mxu0 0.0
  %2386 = vmatprep.mubr.f32.mxu0 0.0
  %2387 = vmatmul.mubr.f32.gmra.mrb[0].mxu0 %v2320
  %v2388 = vpop.f32.mrb[0].mxu0
  %v2389 = vadd.f32 %v2318, %v2388
  %v2390 = vpop.f32.mrb[0].mxu0
  %2391 = vdwg.mxu0
  %v2392 = vmax.f32 %v2389, 0.0
  %2394 = vrot.lane.b32.xlu0 %v2392, 16
  %v2395 = vpop.permute.xlu0 %2394
  %v2397 = vsel %vm38, %v2230, %v2395
  %v2398 = vld [vmem:[%s4 + $0x78] sm:$0xff]
  %v2399 = vld [vmem:[%s4 + $0x80] sm:$0xff]
  %v2400 = vld [vmem:[%s4 + $0x88] sm:$0xff]
  %v2401 = vld [vmem:[%s4 + $0xa8] sm:$0x1]
  %v2402 = vlaneseq
  %v2403 = vshrl.u32 %v2402, 7
  %v2404 = vsub.s32 0, %v2403
  %v2405 = vrot.slane %v2401, %v2404
  %vm2406 = vcmask 195584
  %v2408 = vsel %vm2406, %v2397, 0
  %2410 = vmatprep.subr.mxu0 0.0
  %2411 = vmatpush1.msra.mxu0 %v2398
  %2412 = vmatprep.subr.mxu0 0.0
  %2413 = vmatpush1.msra.mxu0 %v2399
  %2414 = vmatprep.subr.mxu0 0.0
  %2415 = vmatpush1.msra.mxu0 %v2400
  %2416 = vmatprep.subr.mxu0 0.0
  %2417 = vmatpush1.msra.mxu0 0.0
  %2418 = vmatprep.subr.mxu0 0.0
  %2419 = vmatpush1.msra.mxu0 0.0
  %2420 = vmatprep.subr.mxu0 0.0
  %2421 = vmatpush1.msra.mxu0 0.0
  %2422 = vmatprep.subr.mxu0 0.0
  %2423 = vmatpush1.msra.mxu0 0.0
  %2424 = vmatprep.subr.mxu0 0.0
  %2425 = vmatpush1.msra.mxu0 0.0
  %2426 = vmatprep.subr.mxu0 0.0
  %2427 = vmatpush1.msra.mxu0 0.0
  %2428 = vmatprep.subr.mxu0 0.0
  %2429 = vmatpush1.msra.mxu0 0.0
  %2430 = vmatprep.subr.mxu0 0.0
  %2431 = vmatpush1.msra.mxu0 0.0
  %2432 = vmatprep.subr.mxu0 0.0
  %2433 = vmatpush1.msra.mxu0 0.0
  %2434 = vmatprep.subr.mxu0 0.0
  %2435 = vmatpush1.msra.mxu0 0.0
  %2436 = vmatprep.subr.mxu0 0.0
  %2437 = vmatpush1.msra.mxu0 0.0
  %2438 = vmatprep.subr.mxu0 0.0
  %2439 = vmatpush1.msra.mxu0 0.0
  %2440 = vmatprep.subr.mxu0 0.0
  %2441 = vmatpush1.msra.mxu0 0.0
  %2442 = vmatprep.subr.mxu0 0.0
  %2443 = vmatpush1.msra.mxu0 0.0
  %2444 = vmatprep.subr.mxu0 0.0
  %2445 = vmatpush1.msra.mxu0 0.0
  %2446 = vmatprep.subr.mxu0 0.0
  %2447 = vmatpush1.msra.mxu0 0.0
  %2448 = vmatprep.subr.mxu0 0.0
  %2449 = vmatpush1.msra.mxu0 0.0
  %2450 = vmatprep.subr.mxu0 0.0
  %2451 = vmatpush1.msra.mxu0 0.0
  %2452 = vmatprep.subr.mxu0 0.0
  %2453 = vmatpush1.msra.mxu0 0.0
  %2454 = vmatprep.subr.mxu0 0.0
  %2455 = vmatpush1.msra.mxu0 0.0
  %2456 = vmatprep.subr.mxu0 0.0
  %2457 = vmatpush1.msra.mxu0 0.0
  %2458 = vmatprep.subr.mxu0 0.0
  %2459 = vmatpush1.msra.mxu0 0.0
  %2460 = vmatprep.subr.mxu0 0.0
  %2461 = vmatpush1.msra.mxu0 0.0
  %2462 = vmatprep.subr.mxu0 0.0
  %2463 = vmatpush1.msra.mxu0 0.0
  %2464 = vmatprep.subr.mxu0 0.0
  %2465 = vmatpush1.msra.mxu0 0.0
  %2466 = vmatprep.subr.mxu0 0.0
  %2467 = vmatpush1.msra.mxu0 0.0
  %2468 = vmatprep.subr.mxu0 0.0
  %2469 = vmatpush1.msra.mxu0 0.0
  %2470 = vmatprep.subr.mxu0 0.0
  %2471 = vmatpush1.msra.mxu0 0.0
  %2472 = vmatprep.subr.mxu0 0.0
  %2473 = vmatpush1.msra.mxu0 0.0
  %2474 = vmatprep.mubr.f32.mxu0 0.0
  %2475 = vmatmul.mubr.f32.gmra.mrb[0].mxu0 %v2408
  %v2476 = vpop.f32.mrb[0].mxu0
  %v2477 = vadd.f32 %v2405, %v2476
  %v2478 = vpop.f32.mrb[0].mxu0
  %2479 = vdwg.mxu0
  %v2480 = vxor.u32 %v2477, 2147483648
  %v2481 = vmul.f32 %v2480, 1.442695
  %v2482 = vpow.pop %v2481
  %v2483 = vadd.f32 %v2482, 1.0
  %v2484 = vrcp.pop %v2483
  %v2485 = vmul.f32 1.0, %v2484
  %vm2486 = vcmask 7168
  %2487 = vst.msk [vmem:[%s5] sm:$0xff] %vm2486, %v2485
  // Predicated region
  $region22: #{net_forward.1} parent=0 // pred_check
    _
  $region23: #{net_forward.1} parent=0 // pred_check_branch
    %2489 = sbr.rel (0) target = $region25
  $region24: #{net_forward.1} parent=0 // pred_region
    _
  $region25: #{net_forward.1} parent=0 // pred_fallthru
    _
  // Predicated region
  $region26: #{net_forward.1} parent=0 // pred_check
    _
  $region27: #{net_forward.1} parent=0 // pred_check_branch
    %2491 = sbr.rel (0) target = $region29
  $region28: #{net_forward.1} parent=0 // pred_region
    _
  $region29: #{net_forward.1} parent=0 // pred_fallthru
    _

</llo_original>
